<compile_context>
chip_gen: v7x
topology: tpu7x:2x2x1
jax: 0.10.0
libtpu: 0.0.40
codegen_flags: <defaults>
</compile_context>

<pallas_src>
import math

import jax
import jax.numpy as jnp
from jax import lax
from jax.experimental import pallas as pl
from jax.experimental.pallas import tpu as pltpu


HEADS = 4
DIM_HEAD = 32
HIDDEN = HEADS * DIM_HEAD          # 128
TIME_DIM = 256


# ----------------------------------------------------------------------------
# Fused TimeAttention Pallas kernel (channel-on-sublane layout, no transposes)
# ----------------------------------------------------------------------------
def _time_attention_kernel(x_ref, g_ref, wqkv_ref, tqkv_ref, wout_ref,
                           bout_ref, bsum_ref, o_ref):
    """One (batch, row-tile) block of TimeAttention, NCHW-native.

    x_ref    : (1, C, TM)        f32  input (channels on sublanes, spatial on lanes)
    g_ref    : (C, 1)            f32  RMSNorm gain, pre-folded with sqrt(C)
    wqkv_ref : (3*HIDDEN, C)     bf16 to_qkv weight (transposed, no bias)
    tqkv_ref : (1, 3*HIDDEN, 1)  f32  per-batch time q|k|v column
    wout_ref : (C, HIDDEN)       bf16 to_out weight (transposed)
    bout_ref : (C, 1)            f32  to_out bias column
    bsum_ref : (HIDDEN, HIDDEN)  bf16 block-diagonal ones (per-head segment sum)
    o_ref    : (1, C, TM)        f32
    """
    x = x_ref[0]                                          # (C, TM) f32

    # RMSNorm over channels (sublane reduce): x * rsqrt(sum x^2) * (g*sqrt(C)).
    ss = jnp.sum(x * x, axis=0, keepdims=True)            # (1, TM)
    xn = x * lax.rsqrt(jnp.maximum(ss, 1e-24)) * g_ref[...]

    # to_qkv : bf16 operands, f32 accumulation on the MXU; add time q|k|v.
    qkv = jnp.dot(wqkv_ref[...], xn.astype(jnp.bfloat16),
                  preferred_element_type=jnp.float32)     # (384, TM) f32
    qkv = qkv + tqkv_ref[0]                               # (384, 1) lane-broadcast

    scale = DIM_HEAD ** -0.5
    q = qkv[0 * HIDDEN:1 * HIDDEN] * scale                # fold softmax scale once
    k = qkv[1 * HIDDEN:2 * HIDDEN]
    v = qkv[2 * HIDDEN:3 * HIDDEN]

    def head_shift(a, s):
        # Pair head i with head (i+s) % 4 by rotating rows s*DIM_HEAD along the
        # sublane axis (aligned vreg-row shuffle; off the MXU/VPU critical path).
        if s == 0:
            return a
        r = s * DIM_HEAD
        return jnp.concatenate([a[r:], a[:r]], axis=0)

    # Per-position 4x4 head attention at full lane width: the block-diagonal
    # ones matmul sums each head's 32 rows of (q * shifted k), replicating the
    # dot product over the head's rows.  bf16 operands, f32 accumulation.
    bsum = bsum_ref[...]
    sims = [jnp.dot(bsum, (q * head_shift(k, s)).astype(jnp.bfloat16),
                    preferred_element_type=jnp.float32)
            for s in range(HEADS)]

    m = sims[0]
    for s in range(1, HEADS):
        m = jnp.maximum(m, sims[s])
    es = [jnp.exp(sim - m) for sim in sims]               # EUP
    denom = es[0]
    for s in range(1, HEADS):
        denom = denom + es[s]

    acc = es[0] * v                                       # factored epilogue
    for s in range(1, HEADS):
        acc = acc + es[s] * head_shift(v, s)
    out = acc * pl.reciprocal(denom, approx=True)         # (128, TM) f32

    # to_out : bf16 operands, f32 accumulation, bias in epilogue only.
    y = jnp.dot(wout_ref[...], out.astype(jnp.bfloat16),
                preferred_element_type=jnp.float32) + bout_ref[...]
    o_ref[0] = y.astype(o_ref.dtype)                      # lane-dense store


# ----------------------------------------------------------------------------
# VMEM- and megacore-aware row-tile selection
# ----------------------------------------------------------------------------
def _pick_row_tile(hw, c, b):
    # Rough live-VMEM bytes per spatial position: double-buffered (C,TM) f32
    # in/out blocks + the fused f32/bf16 intermediates (qkv, sims, es, acc, ...).
    per_row = 4 * (7 * c + 2304)
    budget = 12 * 1024 * 1024          # safe under v5e/v7x scoped-VMEM defaults
    cands = [t for t in (2048, 1024, 512, 256, 128)
             if hw % t == 0 and t * per_row <= budget]
    tm = cands[0] if cands else hw
    if b == 1 and tm == hw and hw % 2 == 0:
        half = hw // 2
        if half % 128 == 0:            # keep >=2 parallel steps for v7x megacore
            tm = half
    return tm


def _fused_time_attention(x_bcn, g_scaled, wqkv_t, tqkv, wout_t, bout, tm):
    B, C, HW = x_bcn.shape
    # Block-diagonal ones: per-head 32-row segment sum (exact 0/1 in bf16).
    bsum = (jnp.arange(HIDDEN)[:, None] // DIM_HEAD ==
            jnp.arange(HIDDEN)[None, :] // DIM_HEAD).astype(jnp.bfloat16)
    return pl.pallas_call(
        _time_attention_kernel,
        out_shape=jax.ShapeDtypeStruct((B, C, HW), jnp.float32),
        grid=(B, HW // tm),
        in_specs=[
            pl.BlockSpec((1, C, tm), lambda b, m: (b, 0, m)),
            pl.BlockSpec((C, 1), lambda b, m: (0, 0)),
            pl.BlockSpec((3 * HIDDEN, C), lambda b, m: (0, 0)),
            pl.BlockSpec((1, 3 * HIDDEN, 1), lambda b, m: (b, 0, 0)),
            pl.BlockSpec((C, HIDDEN), lambda b, m: (0, 0)),
            pl.BlockSpec((C, 1), lambda b, m: (0, 0)),
            pl.BlockSpec((HIDDEN, HIDDEN), lambda b, m: (0, 0)),
        ],
        out_specs=pl.BlockSpec((1, C, tm), lambda b, m: (b, 0, m)),
        compiler_params=pltpu.CompilerParams(
            dimension_semantics=("parallel", "parallel"),
            vmem_limit_bytes=32 * 1024 * 1024),
    )(x_bcn, g_scaled, wqkv_t, tqkv, wout_t, bout, bsum)


# ----------------------------------------------------------------------------
# Public forward (NCHW interface, like the PyTorch module) — no transposes
# ----------------------------------------------------------------------------
@jax.jit
def time_attention_forward(params, x_nchw, time_emb):
    B, C, H, W = x_nchw.shape
    hw = H * W
    x = x_nchw.reshape(B, C, hw).astype(jnp.float32)       # free reshape (NCHW kept)
    g_scaled = (params["g"] * (C ** 0.5)).reshape(C, 1).astype(jnp.float32)
    bout = params["bout"].reshape(C, 1)
    # Tiny-M (M = batch) time q/k/v 1x1 convs: one fused plain-XLA matmul.
    tqkv = (jnp.dot(time_emb.astype(jnp.float32), params["wt"]) +
            params["bt"]).reshape(B, 3 * HIDDEN, 1)
    out = _fused_time_attention(x, g_scaled, params["wqkv_t"], tqkv,
                                params["wout_t"], bout,
                                _pick_row_tile(hw, C, B))
    return out.reshape(B, C, H, W)


# ----------------------------------------------------------------------------
# Pure-JAX f32 reference (mirrors the PyTorch module math exactly)
# ----------------------------------------------------------------------------
def time_attention_reference(params, x_nchw, time_emb):
    B, C, H, W = x_nchw.shape
    n = H * W
    x = jnp.transpose(x_nchw, (0, 2, 3, 1)).reshape(B, n, C).astype(jnp.float32)
    g = params["g"].reshape(1, 1, C)
    norm = jnp.sqrt(jnp.sum(x * x, axis=-1, keepdims=True))
    xn = x / jnp.maximum(norm, 1e-12) * g * (C ** 0.5)

    qkv = jnp.einsum("bnc,dc->bnd", xn, params["wqkv_t"].astype(jnp.float32))
    q, k, v = jnp.split(qkv, 3, axis=-1)

    tqkv = jnp.dot(time_emb.astype(jnp.float32), params["wt"]) + params["bt"]
    tq, tk, tv = jnp.split(tqkv, 3, axis=-1)

    def heads(a):
        return a.reshape(a.shape[0], a.shape[1], HEADS, DIM_HEAD)

    q = heads(q) + heads(tq[:, None, :])
    k = heads(k) + heads(tk[:, None, :])
    v = heads(v) + heads(tv[:, None, :])

    # Attend receives (b, n, heads, dh): it attends over the 4 heads at each
    # spatial position independently (reproducing the reference exactly).
    sim = jnp.einsum("bnid,bnjd->bnij", q, k) * (DIM_HEAD ** -0.5)
    attn = jax.nn.softmax(sim, axis=-1)
    out = jnp.einsum("bnij,bnjd->bnid", attn, v).reshape(B, n, HIDDEN)

    y = jnp.einsum("bnh,ch->bnc", out, params["wout_t"].astype(jnp.float32))
    y = y + params["bout"]
    return jnp.transpose(y.reshape(B, H, W, C), (0, 3, 1, 2))


# ----------------------------------------------------------------------------
# Deterministic parameter init (kernel-ready transposed bf16 weights)
# ----------------------------------------------------------------------------
def init_params(key, dim, time_dim=TIME_DIM):
    ks = jax.random.split(key, 10)

    def w(k_, fan_in, shape):
        return jax.random.normal(k_, shape, jnp.float32) / math.sqrt(float(fan_in))

    wtq = w(ks[0], time_dim, (time_dim, HIDDEN))
    wtk = w(ks[1], time_dim, (time_dim, HIDDEN))
    wtv = w(ks[2], time_dim, (time_dim, HIDDEN))
    btq = 0.02 * jax.random.normal(ks[3], (HIDDEN,), jnp.float32)
    btk = 0.02 * jax.random.normal(ks[4], (HIDDEN,), jnp.float32)
    btv = 0.02 * jax.random.normal(ks[5], (HIDDEN,), jnp.float32)

    return {
        "g": 1.0 + 0.1 * jax.random.normal(ks[6], (dim,), jnp.float32),
        "wqkv_t": w(ks[7], dim, (3 * HIDDEN, dim)).astype(jnp.bfloat16),
        "wt": jnp.concatenate([wtq, wtk, wtv], axis=1),        # (256, 384)
        "bt": jnp.concatenate([btq, btk, btv], axis=0),        # (384,)
        "wout_t": w(ks[8], HIDDEN, (dim, HIDDEN)).astype(jnp.bfloat16),
        "bout": 0.02 * jax.random.normal(ks[9], (dim,), jnp.float32),
    }


# ----------------------------------------------------------------------------
if __name__ == "__main__":
    key = jax.random.PRNGKey(0)
    kp, kx, kt = jax.random.split(key, 3)

    B, dim, H, W = 2, 64, 16, 16
    params = init_params(kp, dim)
    x = jax.random.normal(kx, (B, dim, H, W), jnp.float32)
    time_emb = jax.random.normal(kt, (B, TIME_DIM), jnp.float32)

    out = time_attention_forward(params, x, time_emb)
    out = jax.block_until_ready(out)

    assert out.shape == (B, dim, H, W), out.shape
    assert bool(jnp.all(jnp.isfinite(out)))

    # Tolerance check vs f32 reference (kernel uses bf16 matmul operands,
    # bf16 segment-sum logits and an approx reciprocal in the softmax).
    ref = time_attention_reference(params, x, time_emb)
    err_max = float(jnp.max(jnp.abs(out - ref)))
    err_mean = float(jnp.mean(jnp.abs(out - ref)))
    assert err_max < 0.25 and err_mean < 0.05, (err_max, err_mean)

    print("KERNEL_OK")
</pallas_src>

<mosaic_0001>
module attributes {stable_mosaic.version = 11 : i64} {
  func.func @_time_attention_kernel(%arg0: i32, %arg1: i32, %arg2: memref<1x64x256xf32, #tpu.memory_space<vmem>>, %arg3: memref<64x1xf32, #tpu.memory_space<vmem>>, %arg4: memref<384x64xbf16, #tpu.memory_space<vmem>>, %arg5: memref<1x384x1xf32, #tpu.memory_space<vmem>>, %arg6: memref<64x128xbf16, #tpu.memory_space<vmem>>, %arg7: memref<64x1xf32, #tpu.memory_space<vmem>>, %arg8: memref<128x128xbf16, #tpu.memory_space<vmem>>, %arg9: memref<1x64x256xf32, #tpu.memory_space<vmem>>) attributes {dimension_semantics = [#tpu.dimension_semantics<parallel>, #tpu.dimension_semantics<parallel>], iteration_bounds = array<i64: 2, 1>, scalar_prefetch = 0 : i64, scratch_operands = 0 : i64, tpu.core_type = #tpu.core_type<tc>, window_params = [{transform_indices = @transform_0, window_bounds = array<i64: 1, 64, 256>}, {pipeline_mode = #tpu.pipeline_mode<synchronous>, transform_indices = @transform_1, window_bounds = array<i64: 64, 1>}, {pipeline_mode = #tpu.pipeline_mode<synchronous>, transform_indices = @transform_2, window_bounds = array<i64: 384, 64>}, {transform_indices = @transform_3, window_bounds = array<i64: 1, 384, 1>}, {pipeline_mode = #tpu.pipeline_mode<synchronous>, transform_indices = @transform_4, window_bounds = array<i64: 64, 128>}, {pipeline_mode = #tpu.pipeline_mode<synchronous>, transform_indices = @transform_5, window_bounds = array<i64: 64, 1>}, {pipeline_mode = #tpu.pipeline_mode<synchronous>, transform_indices = @transform_6, window_bounds = array<i64: 128, 128>}, {transform_indices = @transform_7, window_bounds = array<i64: 1, 64, 256>}]} {
    %c0 = arith.constant 0 : index
    %c0_0 = arith.constant 0 : index
    %c0_1 = arith.constant 0 : index
    %0 = vector.load %arg2[%c0, %c0_0, %c0_1] : memref<1x64x256xf32, #tpu.memory_space<vmem>>, vector<1x64x256xf32>
    %1 = vector.shape_cast %0 : vector<1x64x256xf32> to vector<64x256xf32>
    %2 = arith.mulf %1, %1 : vector<64x256xf32>
    %cst = arith.constant dense<0.000000e+00> : vector<256xf32>
    %3 = vector.multi_reduction <add>, %2, %cst [0] : vector<64x256xf32> to vector<256xf32>
    %4 = vector.shape_cast %3 : vector<256xf32> to vector<1x256xf32>
    %cst_2 = arith.constant 1.000000e-24 : f32
    %5 = vector.broadcast %cst_2 : f32 to vector<1x256xf32>
    %6 = arith.maximumf %4, %5 : vector<1x256xf32>
    %7 = math.rsqrt %6 : vector<1x256xf32>
    %8 = vector.broadcast %7 : vector<1x256xf32> to vector<64x256xf32>
    %9 = arith.mulf %1, %8 : vector<64x256xf32>
    %c0_3 = arith.constant 0 : index
    %c0_4 = arith.constant 0 : index
    %10 = vector.load %arg3[%c0_3, %c0_4] : memref<64x1xf32, #tpu.memory_space<vmem>>, vector<64x1xf32>
    %11 = vector.broadcast %10 : vector<64x1xf32> to vector<64x256xf32>
    %12 = arith.mulf %9, %11 : vector<64x256xf32>
    %c0_5 = arith.constant 0 : index
    %c0_6 = arith.constant 0 : index
    %13 = vector.load %arg4[%c0_5, %c0_6] : memref<384x64xbf16, #tpu.memory_space<vmem>>, vector<384x64xbf16>
    %14 = arith.truncf %12 : vector<64x256xf32> to vector<64x256xbf16>
    %cst_7 = arith.constant dense<0.000000e+00> : vector<384x256xf32>
    %15 = tpu.matmul %13, %14, %cst_7 {dimension_numbers = #tpu.dot_dimension_numbers<[1], [0], [0], [1], [0, 0, 1, 1], [], []>} : vector<384x64xbf16>, vector<64x256xbf16>, vector<384x256xf32> -> vector<384x256xf32>
    %c0_8 = arith.constant 0 : index
    %c0_9 = arith.constant 0 : index
    %c0_10 = arith.constant 0 : index
    %16 = vector.load %arg5[%c0_8, %c0_9, %c0_10] : memref<1x384x1xf32, #tpu.memory_space<vmem>>, vector<1x384x1xf32>
    %17 = vector.shape_cast %16 : vector<1x384x1xf32> to vector<384x1xf32>
    %18 = vector.broadcast %17 : vector<384x1xf32> to vector<384x256xf32>
    %19 = arith.addf %15, %18 : vector<384x256xf32>
    %20 = vector.extract_strided_slice %19 {offsets = [0, 0], sizes = [128, 256], strides = [1, 1]} : vector<384x256xf32> to vector<128x256xf32>
    %cst_11 = arith.constant 0.176776692 : f32
    %21 = vector.broadcast %cst_11 : f32 to vector<128x256xf32>
    %22 = arith.mulf %20, %21 : vector<128x256xf32>
    %23 = vector.extract_strided_slice %19 {offsets = [128, 0], sizes = [128, 256], strides = [1, 1]} : vector<384x256xf32> to vector<128x256xf32>
    %24 = vector.extract_strided_slice %19 {offsets = [256, 0], sizes = [128, 256], strides = [1, 1]} : vector<384x256xf32> to vector<128x256xf32>
    %c0_12 = arith.constant 0 : index
    %c0_13 = arith.constant 0 : index
    %25 = vector.load %arg8[%c0_12, %c0_13] : memref<128x128xbf16, #tpu.memory_space<vmem>>, vector<128x128xbf16>
    %26 = arith.mulf %22, %23 : vector<128x256xf32>
    %27 = arith.truncf %26 : vector<128x256xf32> to vector<128x256xbf16>
    %cst_14 = arith.constant dense<0.000000e+00> : vector<128x256xf32>
    %28 = tpu.matmul %25, %27, %cst_14 {dimension_numbers = #tpu.dot_dimension_numbers<[1], [0], [0], [1], [0, 0, 1, 1], [], []>} : vector<128x128xbf16>, vector<128x256xbf16>, vector<128x256xf32> -> vector<128x256xf32>
    %29 = vector.extract_strided_slice %23 {offsets = [32, 0], sizes = [96, 256], strides = [1, 1]} : vector<128x256xf32> to vector<96x256xf32>
    %30 = vector.extract_strided_slice %23 {offsets = [0, 0], sizes = [32, 256], strides = [1, 1]} : vector<128x256xf32> to vector<32x256xf32>
    %31 = tpu.concatenate %29, %30 in 0 : vector<96x256xf32>, vector<32x256xf32> -> vector<128x256xf32>
    %32 = arith.mulf %22, %31 : vector<128x256xf32>
    %33 = arith.truncf %32 : vector<128x256xf32> to vector<128x256xbf16>
    %cst_15 = arith.constant dense<0.000000e+00> : vector<128x256xf32>
    %34 = tpu.matmul %25, %33, %cst_15 {dimension_numbers = #tpu.dot_dimension_numbers<[1], [0], [0], [1], [0, 0, 1, 1], [], []>} : vector<128x128xbf16>, vector<128x256xbf16>, vector<128x256xf32> -> vector<128x256xf32>
    %35 = vector.extract_strided_slice %23 {offsets = [64, 0], sizes = [64, 256], strides = [1, 1]} : vector<128x256xf32> to vector<64x256xf32>
    %36 = vector.extract_strided_slice %23 {offsets = [0, 0], sizes = [64, 256], strides = [1, 1]} : vector<128x256xf32> to vector<64x256xf32>
    %37 = tpu.concatenate %35, %36 in 0 : vector<64x256xf32>, vector<64x256xf32> -> vector<128x256xf32>
    %38 = arith.mulf %22, %37 : vector<128x256xf32>
    %39 = arith.truncf %38 : vector<128x256xf32> to vector<128x256xbf16>
    %cst_16 = arith.constant dense<0.000000e+00> : vector<128x256xf32>
    %40 = tpu.matmul %25, %39, %cst_16 {dimension_numbers = #tpu.dot_dimension_numbers<[1], [0], [0], [1], [0, 0, 1, 1], [], []>} : vector<128x128xbf16>, vector<128x256xbf16>, vector<128x256xf32> -> vector<128x256xf32>
    %41 = vector.extract_strided_slice %23 {offsets = [96, 0], sizes = [32, 256], strides = [1, 1]} : vector<128x256xf32> to vector<32x256xf32>
    %42 = vector.extract_strided_slice %23 {offsets = [0, 0], sizes = [96, 256], strides = [1, 1]} : vector<128x256xf32> to vector<96x256xf32>
    %43 = tpu.concatenate %41, %42 in 0 : vector<32x256xf32>, vector<96x256xf32> -> vector<128x256xf32>
    %44 = arith.mulf %22, %43 : vector<128x256xf32>
    %45 = arith.truncf %44 : vector<128x256xf32> to vector<128x256xbf16>
    %cst_17 = arith.constant dense<0.000000e+00> : vector<128x256xf32>
    %46 = tpu.matmul %25, %45, %cst_17 {dimension_numbers = #tpu.dot_dimension_numbers<[1], [0], [0], [1], [0, 0, 1, 1], [], []>} : vector<128x128xbf16>, vector<128x256xbf16>, vector<128x256xf32> -> vector<128x256xf32>
    %47 = arith.maximumf %28, %34 : vector<128x256xf32>
    %48 = arith.maximumf %47, %40 : vector<128x256xf32>
    %49 = arith.maximumf %48, %46 : vector<128x256xf32>
    %50 = arith.subf %28, %49 : vector<128x256xf32>
    %51 = math.exp %50 : vector<128x256xf32>
    %52 = arith.subf %34, %49 : vector<128x256xf32>
    %53 = math.exp %52 : vector<128x256xf32>
    %54 = arith.subf %40, %49 : vector<128x256xf32>
    %55 = math.exp %54 : vector<128x256xf32>
    %56 = arith.subf %46, %49 : vector<128x256xf32>
    %57 = math.exp %56 : vector<128x256xf32>
    %58 = arith.addf %51, %53 : vector<128x256xf32>
    %59 = arith.addf %58, %55 : vector<128x256xf32>
    %60 = arith.addf %59, %57 : vector<128x256xf32>
    %61 = arith.mulf %51, %24 : vector<128x256xf32>
    %62 = vector.extract_strided_slice %24 {offsets = [32, 0], sizes = [96, 256], strides = [1, 1]} : vector<128x256xf32> to vector<96x256xf32>
    %63 = vector.extract_strided_slice %24 {offsets = [0, 0], sizes = [32, 256], strides = [1, 1]} : vector<128x256xf32> to vector<32x256xf32>
    %64 = tpu.concatenate %62, %63 in 0 : vector<96x256xf32>, vector<32x256xf32> -> vector<128x256xf32>
    %65 = arith.mulf %53, %64 : vector<128x256xf32>
    %66 = arith.addf %61, %65 : vector<128x256xf32>
    %67 = vector.extract_strided_slice %24 {offsets = [64, 0], sizes = [64, 256], strides = [1, 1]} : vector<128x256xf32> to vector<64x256xf32>
    %68 = vector.extract_strided_slice %24 {offsets = [0, 0], sizes = [64, 256], strides = [1, 1]} : vector<128x256xf32> to vector<64x256xf32>
    %69 = tpu.concatenate %67, %68 in 0 : vector<64x256xf32>, vector<64x256xf32> -> vector<128x256xf32>
    %70 = arith.mulf %55, %69 : vector<128x256xf32>
    %71 = arith.addf %66, %70 : vector<128x256xf32>
    %72 = vector.extract_strided_slice %24 {offsets = [96, 0], sizes = [32, 256], strides = [1, 1]} : vector<128x256xf32> to vector<32x256xf32>
    %73 = vector.extract_strided_slice %24 {offsets = [0, 0], sizes = [96, 256], strides = [1, 1]} : vector<128x256xf32> to vector<96x256xf32>
    %74 = tpu.concatenate %72, %73 in 0 : vector<32x256xf32>, vector<96x256xf32> -> vector<128x256xf32>
    %75 = arith.mulf %57, %74 : vector<128x256xf32>
    %76 = arith.addf %71, %75 : vector<128x256xf32>
    %77 = tpu.reciprocal %60 {approx = true} : vector<128x256xf32> -> vector<128x256xf32>
    %78 = arith.mulf %76, %77 : vector<128x256xf32>
    %c0_18 = arith.constant 0 : index
    %c0_19 = arith.constant 0 : index
    %79 = vector.load %arg6[%c0_18, %c0_19] : memref<64x128xbf16, #tpu.memory_space<vmem>>, vector<64x128xbf16>
    %80 = arith.truncf %78 : vector<128x256xf32> to vector<128x256xbf16>
    %cst_20 = arith.constant dense<0.000000e+00> : vector<64x256xf32>
    %81 = tpu.matmul %79, %80, %cst_20 {dimension_numbers = #tpu.dot_dimension_numbers<[1], [0], [0], [1], [0, 0, 1, 1], [], []>} : vector<64x128xbf16>, vector<128x256xbf16>, vector<64x256xf32> -> vector<64x256xf32>
    %c0_21 = arith.constant 0 : index
    %c0_22 = arith.constant 0 : index
    %82 = vector.load %arg7[%c0_21, %c0_22] : memref<64x1xf32, #tpu.memory_space<vmem>>, vector<64x1xf32>
    %83 = vector.broadcast %82 : vector<64x1xf32> to vector<64x256xf32>
    %84 = arith.addf %81, %83 : vector<64x256xf32>
    %c0_23 = arith.constant 0 : index
    %c0_24 = arith.constant 0 : index
    %c0_25 = arith.constant 0 : index
    %85 = vector.load %arg9[%c0_23, %c0_24, %c0_25] : memref<1x64x256xf32, #tpu.memory_space<vmem>>, vector<1x64x256xf32>
    %86 = vector.shape_cast %85 : vector<1x64x256xf32> to vector<64x256xf32>
    %87 = vector.shape_cast %84 : vector<64x256xf32> to vector<1x64x256xf32>
    tpu.vector_store %arg9[%c0_23, %c0_24, %c0_25], %87 {strides = array<i32>} : memref<1x64x256xf32, #tpu.memory_space<vmem>>, vector<1x64x256xf32>,
    return
  }
  func.func @transform_0(%arg0: i32, %arg1: i32) -> (i32, i32, i32) {
    %c0_i32 = arith.constant 0 : i32
    %c0_i32_0 = arith.constant 0 : i32
    return %arg0, %c0_i32, %arg1 : i32, i32, i32
  }
  func.func @transform_1(%arg0: i32, %arg1: i32) -> (i32, i32) {
    %c0_i32 = arith.constant 0 : i32
    %c0_i32_0 = arith.constant 0 : i32
    %c0_i32_1 = arith.constant 0 : i32
    return %c0_i32, %c0_i32_0 : i32, i32
  }
  func.func @transform_2(%arg0: i32, %arg1: i32) -> (i32, i32) {
    %c0_i32 = arith.constant 0 : i32
    %c0_i32_0 = arith.constant 0 : i32
    %c0_i32_1 = arith.constant 0 : i32
    return %c0_i32, %c0_i32_0 : i32, i32
  }
  func.func @transform_3(%arg0: i32, %arg1: i32) -> (i32, i32, i32) {
    %c0_i32 = arith.constant 0 : i32
    %c0_i32_0 = arith.constant 0 : i32
    %c0_i32_1 = arith.constant 0 : i32
    return %arg0, %c0_i32, %c0_i32_0 : i32, i32, i32
  }
  func.func @transform_4(%arg0: i32, %arg1: i32) -> (i32, i32) {
    %c0_i32 = arith.constant 0 : i32
    %c0_i32_0 = arith.constant 0 : i32
    %c0_i32_1 = arith.constant 0 : i32
    return %c0_i32, %c0_i32_0 : i32, i32
  }
  func.func @transform_5(%arg0: i32, %arg1: i32) -> (i32, i32) {
    %c0_i32 = arith.constant 0 : i32
    %c0_i32_0 = arith.constant 0 : i32
    %c0_i32_1 = arith.constant 0 : i32
    return %c0_i32, %c0_i32_0 : i32, i32
  }
  func.func @transform_6(%arg0: i32, %arg1: i32) -> (i32, i32) {
    %c0_i32 = arith.constant 0 : i32
    %c0_i32_0 = arith.constant 0 : i32
    %c0_i32_1 = arith.constant 0 : i32
    return %c0_i32, %c0_i32_0 : i32, i32
  }
  func.func @transform_7(%arg0: i32, %arg1: i32) -> (i32, i32, i32) {
    %c0_i32 = arith.constant 0 : i32
    %c0_i32_0 = arith.constant 0 : i32
    return %arg0, %c0_i32, %arg1 : i32, i32, i32
  }
}

</mosaic_0001>

<llo_original>
// kernel: time_attention_forward.1
$region0: #{time_attention_forward.1}
  #allocation0 [shape = 'u32[]', space=smem, size = 0x4, offset = 0x4, fixed_abs, tag = 'smem constant byte address 0x4 - core index']
  #allocation1 [shape = 'u32[144,128]{1,0:T(1,128)}', space=vmem, size = 0x12000, scoped, tag = 'internal scratch']
  %s0 = inlined_call_operand.vmem [shape: f32[2,64,256], index: 0, kind: input, shape index: {}]
  %s1 = inlined_call_operand.vmem [shape: f32[64,1], index: 1, kind: input, shape index: {}]
  %s2 = inlined_call_operand.vmem [shape: bf16[384,64], index: 2, kind: input, shape index: {}]
  %s3 = inlined_call_operand.vmem [shape: f32[2,384,1], index: 3, kind: input, shape index: {}]
  %s4 = inlined_call_operand.vmem [shape: bf16[64,128], index: 4, kind: input, shape index: {}]
  %s5 = inlined_call_operand.vmem [shape: f32[64,1], index: 5, kind: input, shape index: {}]
  %s6 = inlined_call_operand.vmem [shape: bf16[128,128], index: 6, kind: input, shape index: {}]
  %s7 = inlined_call_operand.vmem [shape: f32[2,64,256], index: 7, kind: output, shape index: {}]
  %s8 = sld [smem:[#allocation0]]
  $region61: #{time_attention_forward.1} parent=0
    _
  %s10 = ssub.s32 1, %s8
  %s11 = scalar_select 0, %s10, %s8
  loop: start=0, step=1, limit=4
  $region2: #{time_attention_forward.1} parent=0 // loop_pre_header
    _
  $region3: #{time_attention_forward.1} parent=0 // loop_header
    %s13 = sphi 0, %s17
    %p14 = scmp.ge.s32.totalorder %s13, 4
    %s20 = sphi 0, %s32
    %s21 = sphi 0, %s28
    %s22 = sphi 0, %s20
    %s23 = sphi 0, %s21
    %s24 = sphi 0, %s22
    %s25 = sphi 0, %s23
    %s37 = sphi 0, %s39
    %s40 = sphi 0, %s37
    %s41 = sphi 0, %s40
    %s57 = sphi 0, %s41
    %s61 = sphi 0, %s61
    %s63 = sphi 0, %s61
    %s64 = sphi 0, %s63
    %s78 = sphi 0, %s64
    %s82 = sphi 0, %s82
    %s84 = sphi 0, %s82
    %s85 = sphi 0, %s84
    %s99 = sphi 0, %s85
    %s105 = sphi 0, %s107
    %s108 = sphi 0, %s105
    %s109 = sphi 0, %s108
    %s125 = sphi 0, %s109
    %s129 = sphi 0, %s129
    %s131 = sphi 0, %s129
    %s132 = sphi 0, %s131
    %s146 = sphi 0, %s132
    %s150 = sphi 0, %s150
    %s152 = sphi 0, %s150
    %s153 = sphi 0, %s152
    %s167 = sphi 0, %s153
    %s171 = sphi 0, %s171
    %s173 = sphi 0, %s171
    %s174 = sphi 0, %s173
    %s188 = sphi 0, %s174
    %s196 = sphi 0, %s198
    %s199 = sphi 0, %s196
    %s200 = sphi 0, %s199
    %s216 = sphi 0, %s200
  $region4: #{time_attention_forward.1} parent=0 // loop_header_branch
    %16 = sbr.rel (%p14) target = $region8
  $region5: #{time_attention_forward.1} parent=0 // loop_body
    %s18 = ssub.s32 %s13, 1
    %s19 = ssub.s32 %s13, 2
    %s26 = sadd.s32 1, %s21
    %p27 = scmp.ge.s32.totalorder %s26, 1
    %s28 = scalar_select %p27, 0, %s26
    %s29 = sadd.s32 1, %s20
    %s30 = scalar_select %p27, %s29, %s20
    %p31 = scmp.ge.s32.totalorder %s30, 2
    %s32 = scalar_select %p31, 0, %s30
    %s33 = ssub.s32 %s20, %s32
    %s34 = ssub.s32 %s21, %s28
    %s35 = sor.u32 %s33, %s34
    %p36 = scmp.eq.s32.totalorder %s35, 0
    %s38 = sadd.s32 %s37, 1
    %s39 = scalar_select %p36, %s37, %s38
    %p42 = pneg %p36
    %p43 = scmp.eq.s32.totalorder %s13, 1
    %p44 = por %p42, %p43
    %p45 = scmp.ne.s32.totalorder %s37, %s40
    %p46 = scmp.eq.s32.totalorder %s13, 0
    %p47 = por %p45, %p46
    %p48 = scmp.ne.s32.totalorder %s37, %s40
    %p49 = scmp.eq.s32.totalorder %s18, 1
    %p50 = por %p48, %p49
    %p51 = scmp.ne.s32.totalorder %s40, %s41
    %p52 = scmp.eq.s32.totalorder %s18, 0
    %p53 = por %p51, %p52
    %p54 = scmp.ne.s32.totalorder %s40, %s41
    %p55 = scmp.eq.s32.totalorder %s19, 1
    %p56 = por %p54, %p55
    %p58 = scmp.ne.s32.totalorder %s41, %s57
    %p59 = scmp.eq.s32.totalorder %s19, 0
    %p60 = por %p58, %p59
    %s62 = sadd.s32 %s61, 1
    %p65 = scmp.eq.s32.totalorder %s13, 1
    %p66 = scmp.ne.s32.totalorder %s61, %s63
    %p67 = scmp.eq.s32.totalorder %s13, 0
    %p68 = por %p66, %p67
    %p69 = scmp.ne.s32.totalorder %s61, %s63
    %p70 = scmp.eq.s32.totalorder %s18, 1
    %p71 = por %p69, %p70
    %p72 = scmp.ne.s32.totalorder %s63, %s64
    %p73 = scmp.eq.s32.totalorder %s18, 0
    %p74 = por %p72, %p73
    %p75 = scmp.ne.s32.totalorder %s63, %s64
    %p76 = scmp.eq.s32.totalorder %s19, 1
    %p77 = por %p75, %p76
    %p79 = scmp.ne.s32.totalorder %s64, %s78
    %p80 = scmp.eq.s32.totalorder %s19, 0
    %p81 = por %p79, %p80
    %s83 = sadd.s32 %s82, 1
    %p86 = scmp.eq.s32.totalorder %s13, 1
    %p87 = scmp.ne.s32.totalorder %s82, %s84
    %p88 = scmp.eq.s32.totalorder %s13, 0
    %p89 = por %p87, %p88
    %p90 = scmp.ne.s32.totalorder %s82, %s84
    %p91 = scmp.eq.s32.totalorder %s18, 1
    %p92 = por %p90, %p91
    %p93 = scmp.ne.s32.totalorder %s84, %s85
    %p94 = scmp.eq.s32.totalorder %s18, 0
    %p95 = por %p93, %p94
    %p96 = scmp.ne.s32.totalorder %s84, %s85
    %p97 = scmp.eq.s32.totalorder %s19, 1
    %p98 = por %p96, %p97
    %p100 = scmp.ne.s32.totalorder %s85, %s99
    %p101 = scmp.eq.s32.totalorder %s19, 0
    %p102 = por %p100, %p101
    %s103 = ssub.s32 %s20, %s32
    %p104 = scmp.eq.s32.totalorder %s103, 0
    %s106 = sadd.s32 %s105, 1
    %s107 = scalar_select %p104, %s105, %s106
    %p110 = pneg %p104
    %p111 = scmp.eq.s32.totalorder %s13, 1
    %p112 = por %p110, %p111
    %p113 = scmp.ne.s32.totalorder %s105, %s108
    %p114 = scmp.eq.s32.totalorder %s13, 0
    %p115 = por %p113, %p114
    %p116 = scmp.ne.s32.totalorder %s105, %s108
    %p117 = scmp.eq.s32.totalorder %s18, 1
    %p118 = por %p116, %p117
    %p119 = scmp.ne.s32.totalorder %s108, %s109
    %p120 = scmp.eq.s32.totalorder %s18, 0
    %p121 = por %p119, %p120
    %p122 = scmp.ne.s32.totalorder %s108, %s109
    %p123 = scmp.eq.s32.totalorder %s19, 1
    %p124 = por %p122, %p123
    %p126 = scmp.ne.s32.totalorder %s109, %s125
    %p127 = scmp.eq.s32.totalorder %s19, 0
    %p128 = por %p126, %p127
    %s130 = sadd.s32 %s129, 1
    %p133 = scmp.eq.s32.totalorder %s13, 1
    %p134 = scmp.ne.s32.totalorder %s129, %s131
    %p135 = scmp.eq.s32.totalorder %s13, 0
    %p136 = por %p134, %p135
    %p137 = scmp.ne.s32.totalorder %s129, %s131
    %p138 = scmp.eq.s32.totalorder %s18, 1
    %p139 = por %p137, %p138
    %p140 = scmp.ne.s32.totalorder %s131, %s132
    %p141 = scmp.eq.s32.totalorder %s18, 0
    %p142 = por %p140, %p141
    %p143 = scmp.ne.s32.totalorder %s131, %s132
    %p144 = scmp.eq.s32.totalorder %s19, 1
    %p145 = por %p143, %p144
    %p147 = scmp.ne.s32.totalorder %s132, %s146
    %p148 = scmp.eq.s32.totalorder %s19, 0
    %p149 = por %p147, %p148
    %s151 = sadd.s32 %s150, 1
    %p154 = scmp.eq.s32.totalorder %s13, 1
    %p155 = scmp.ne.s32.totalorder %s150, %s152
    %p156 = scmp.eq.s32.totalorder %s13, 0
    %p157 = por %p155, %p156
    %p158 = scmp.ne.s32.totalorder %s150, %s152
    %p159 = scmp.eq.s32.totalorder %s18, 1
    %p160 = por %p158, %p159
    %p161 = scmp.ne.s32.totalorder %s152, %s153
    %p162 = scmp.eq.s32.totalorder %s18, 0
    %p163 = por %p161, %p162
    %p164 = scmp.ne.s32.totalorder %s152, %s153
    %p165 = scmp.eq.s32.totalorder %s19, 1
    %p166 = por %p164, %p165
    %p168 = scmp.ne.s32.totalorder %s153, %s167
    %p169 = scmp.eq.s32.totalorder %s19, 0
    %p170 = por %p168, %p169
    %s172 = sadd.s32 %s171, 1
    %p175 = scmp.eq.s32.totalorder %s13, 1
    %p176 = scmp.ne.s32.totalorder %s171, %s173
    %p177 = scmp.eq.s32.totalorder %s13, 0
    %p178 = por %p176, %p177
    %p179 = scmp.ne.s32.totalorder %s171, %s173
    %p180 = scmp.eq.s32.totalorder %s18, 1
    %p181 = por %p179, %p180
    %p182 = scmp.ne.s32.totalorder %s173, %s174
    %p183 = scmp.eq.s32.totalorder %s18, 0
    %p184 = por %p182, %p183
    %p185 = scmp.ne.s32.totalorder %s173, %s174
    %p186 = scmp.eq.s32.totalorder %s19, 1
    %p187 = por %p185, %p186
    %p189 = scmp.ne.s32.totalorder %s174, %s188
    %p190 = scmp.eq.s32.totalorder %s19, 0
    %p191 = por %p189, %p190
    %s192 = ssub.s32 %s20, %s32
    %s193 = ssub.s32 %s21, %s28
    %s194 = sor.u32 %s192, %s193
    %p195 = scmp.eq.s32.totalorder %s194, 0
    %s197 = sadd.s32 %s196, 1
    %s198 = scalar_select %p195, %s196, %s197
    %p201 = pneg %p195
    %p202 = scmp.eq.s32.totalorder %s13, 1
    %p203 = por %p201, %p202
    %p204 = scmp.ne.s32.totalorder %s196, %s199
    %p205 = scmp.eq.s32.totalorder %s13, 0
    %p206 = por %p204, %p205
    %p207 = scmp.ne.s32.totalorder %s196, %s199
    %p208 = scmp.eq.s32.totalorder %s18, 1
    %p209 = por %p207, %p208
    %p210 = scmp.ne.s32.totalorder %s199, %s200
    %p211 = scmp.eq.s32.totalorder %s18, 0
    %p212 = por %p210, %p211
    %p213 = scmp.ne.s32.totalorder %s199, %s200
    %p214 = scmp.eq.s32.totalorder %s19, 1
    %p215 = por %p213, %p214
    %p217 = scmp.ne.s32.totalorder %s200, %s216
    %p218 = scmp.eq.s32.totalorder %s19, 0
    %p219 = por %p217, %p218
    %p220 = scmp.le.s32.totalorder 1, %s13
    %p221 = scmp.lt.s32.totalorder %s13, 3
    %p222 = pnand %p220, %p221
    %p223 = pneg %p222
    // Predicated region
    $region9: #{time_attention_forward.1} parent=5 // pred_check
      _
    $region10: #{time_attention_forward.1} parent=5 // pred_check_branch
      %225 = sbr.rel (%p222) target = $region12
    $region11: #{time_attention_forward.1} parent=5 // pred_region
      %s226 = ssub.s32 %s13, 1
      // Predicated region
      $region13: #{time_attention_forward.1} parent=11 // pred_check
        %p227 = pneg %p74
      $region14: #{time_attention_forward.1} parent=11 // pred_check_branch
        %229 = sbr.rel (%p227) target = $region16
      $region15: #{time_attention_forward.1} parent=11 // pred_region
        _
      $region16: #{time_attention_forward.1} parent=11 // pred_fallthru
        _
      // Predicated region
      $region17: #{time_attention_forward.1} parent=11 // pred_check
        %p230 = pneg %p95
      $region18: #{time_attention_forward.1} parent=11 // pred_check_branch
        %232 = sbr.rel (%p230) target = $region20
      $region19: #{time_attention_forward.1} parent=11 // pred_region
        _
      $region20: #{time_attention_forward.1} parent=11 // pred_fallthru
        _
      // Predicated region
      $region21: #{time_attention_forward.1} parent=11 // pred_check
        %p233 = pneg %p142
      $region22: #{time_attention_forward.1} parent=11 // pred_check_branch
        %235 = sbr.rel (%p233) target = $region24
      $region23: #{time_attention_forward.1} parent=11 // pred_region
        _
      $region24: #{time_attention_forward.1} parent=11 // pred_fallthru
        _
      // Predicated region
      $region25: #{time_attention_forward.1} parent=11 // pred_check
        %p236 = pneg %p163
      $region26: #{time_attention_forward.1} parent=11 // pred_check_branch
        %238 = sbr.rel (%p236) target = $region28
      $region27: #{time_attention_forward.1} parent=11 // pred_region
        _
      $region28: #{time_attention_forward.1} parent=11 // pred_fallthru
        _
      // Predicated region
      $region29: #{time_attention_forward.1} parent=11 // pred_check
        %p239 = pneg %p184
      $region30: #{time_attention_forward.1} parent=11 // pred_check_branch
        %241 = sbr.rel (%p239) target = $region32
      $region31: #{time_attention_forward.1} parent=11 // pred_region
        _
      $region32: #{time_attention_forward.1} parent=11 // pred_fallthru
        _
    $region12: #{time_attention_forward.1} parent=5 // pred_fallthru
      _
    %p242 = scmp.lt.s32.totalorder %s13, 2
    // Predicated region
    $region33: #{time_attention_forward.1} parent=5 // pred_check
      %p243 = pneg %p242
    $region34: #{time_attention_forward.1} parent=5 // pred_check_branch
      %245 = sbr.rel (%p243) target = $region36
    $region35: #{time_attention_forward.1} parent=5 // pred_region
      // Predicated region
      $region37: #{time_attention_forward.1} parent=35 // pred_check
        %p246 = pneg %p47
      $region38: #{time_attention_forward.1} parent=35 // pred_check_branch
        %248 = sbr.rel (%p246) target = $region40
      $region39: #{time_attention_forward.1} parent=35 // pred_region
        %s249 = smul.u32 2, %s21
        %p250 = scmp.lt.s32.totalorder %s20, 1
        %s251 = scalar_select %p250, %s20, 1
        %p252 = scmp.lt.s32.totalorder %s249, 1
        %s253 = scalar_select %p252, %s249, 1
        %s254 = smul.addr %s251, 16
        %s255 = sadd.s32 %s253, %s254
        %s256 = smul.addr %s255, 8
        %s257 = scalar_lea.vmem %s0, %s256
        %s258 = smul.u32 2, %s21
      $region40: #{time_attention_forward.1} parent=35 // pred_fallthru
        _
      // Predicated region
      $region41: #{time_attention_forward.1} parent=35 // pred_check
        %p259 = pneg %p115
      $region42: #{time_attention_forward.1} parent=35 // pred_check_branch
        %261 = sbr.rel (%p259) target = $region44
      $region43: #{time_attention_forward.1} parent=35 // pred_region
        %p262 = scmp.lt.s32.totalorder %s20, 1
        %s263 = scalar_select %p262, %s20, 1
        %s264 = smul.addr %s263, 48
        %s265 = smul.addr %s264, 8
        %s266 = scalar_lea.vmem %s3, %s265
      $region44: #{time_attention_forward.1} parent=35 // pred_fallthru
        _
    $region36: #{time_attention_forward.1} parent=5 // pred_fallthru
      _
    %p267 = scmp.le.s32.totalorder 1, %s13
    %p268 = scmp.lt.s32.totalorder %s13, 3
    %p269 = pnand %p267, %p268
    %p270 = pneg %p269
    // Predicated region
    $region45: #{time_attention_forward.1} parent=5 // pred_check
      _
    $region46: #{time_attention_forward.1} parent=5 // pred_check_branch
      %272 = sbr.rel (%p269) target = $region48
    $region47: #{time_attention_forward.1} parent=5 // pred_region
      %s273 = ssub.s32 %s13, 1
      %s274 = smul.u32 2, %s23
      %p275 = scmp.lt.s32.totalorder %s22, 1
      %s276 = scalar_select %p275, %s22, 1
      %p277 = scmp.lt.s32.totalorder %s274, 1
      %s278 = scalar_select %p277, %s274, 1
      %s279 = smul.addr %s276, 16
      %s280 = sadd.s32 %s278, %s279
      %s281 = smul.addr %s280, 8
      %s282 = scalar_lea.vmem %s0, %s281
      %p283 = pneg %p53
      %p284 = pneg %p50
      %p285 = pneg %p74
      %p286 = pneg %p71
      %p287 = pneg %p95
      %p288 = pneg %p92
      %p289 = scmp.lt.s32.totalorder %s22, 1
      %s290 = scalar_select %p289, %s22, 1
      %s291 = smul.addr %s290, 48
      %s292 = smul.addr %s291, 8
      %s293 = scalar_lea.vmem %s3, %s292
      %p294 = pneg %p121
      %p295 = pneg %p118
      %p296 = pneg %p142
      %p297 = pneg %p139
      %p298 = pneg %p163
      %p299 = pneg %p160
      %p300 = pneg %p184
      %p301 = pneg %p181
      %p302 = pneg %p212
      %p303 = pneg %p209
      %s304 = smul.u32 2, %s23
      %p305 = scmp.lt.s32.totalorder %s22, 1
      %s306 = scalar_select %p305, %s22, 1
      %p307 = scmp.lt.s32.totalorder %s304, 1
      %s308 = scalar_select %p307, %s304, 1
      %s309 = smul.addr %s306, 16
      %s310 = sadd.s32 %s308, %s309
      %s311 = smul.addr %s310, 8
      %s312 = scalar_lea.vmem %s7, %s311
      %s313 = smul.u32 2, %s23
      %p314 = scmp.lt.s32.totalorder %s22, 1
      %s315 = scalar_select %p314, %s22, 1
      %p316 = scmp.lt.s32.totalorder %s313, 1
      %s317 = scalar_select %p316, %s313, 1
      %s318 = smul.addr %s315, 16
      %s319 = sadd.s32 %s317, %s318
      %s320 = smul.addr %s319, 8
      %s321 = scalar_lea.vmem %s0, %s320
      %s322 = smul.u32 2, %s23
      %p323 = scmp.lt.s32.totalorder %s22, 1
      %s324 = scalar_select %p323, %s22, 1
      %s325 = smul.addr %s324, 48
      %s326 = smul.addr %s325, 8
      %s327 = scalar_lea.vmem %s3, %s326
      %s328 = smul.u32 2, %s23
      %p329 = scmp.lt.s32.totalorder %s22, 1
      %s330 = scalar_select %p329, %s22, 1
      %p331 = scmp.lt.s32.totalorder %s328, 1
      %s332 = scalar_select %p331, %s328, 1
      %s333 = smul.addr %s330, 16
      %s334 = sadd.s32 %s332, %s333
      %s335 = smul.addr %s334, 8
      %s336 = scalar_lea.vmem %s7, %s335
      %s337 = smul.u32 2, %s23
      %v339 = vld [vmem:[%s321] sm:$0xff]
      %v340 = vld [vmem:[%s321 + $0x8] sm:$0xff]
      %v341 = vld [vmem:[%s321 + $0x10] sm:$0xff]
      %v342 = vld [vmem:[%s321 + $0x18] sm:$0xff]
      %v343 = vld [vmem:[%s321 + $0x20] sm:$0xff]
      %v344 = vld [vmem:[%s321 + $0x28] sm:$0xff]
      %v345 = vld [vmem:[%s321 + $0x30] sm:$0xff]
      %v346 = vld [vmem:[%s321 + $0x38] sm:$0xff]
      %v347 = vld [vmem:[%s321 + $0x40] sm:$0xff]
      %v348 = vld [vmem:[%s321 + $0x48] sm:$0xff]
      %v349 = vld [vmem:[%s321 + $0x50] sm:$0xff]
      %v350 = vld [vmem:[%s321 + $0x58] sm:$0xff]
      %v351 = vld [vmem:[%s321 + $0x60] sm:$0xff]
      %v352 = vld [vmem:[%s321 + $0x68] sm:$0xff]
      %v353 = vld [vmem:[%s321 + $0x70] sm:$0xff]
      %v354 = vld [vmem:[%s321 + $0x78] sm:$0xff]
      %v355 = vmul.f32 %v339, %v339
      %v356 = vmul.f32 %v340, %v340
      %v357 = vmul.f32 %v341, %v341
      %v358 = vmul.f32 %v342, %v342
      %v359 = vmul.f32 %v343, %v343
      %v360 = vmul.f32 %v344, %v344
      %v361 = vmul.f32 %v345, %v345
      %v362 = vmul.f32 %v346, %v346
      %v363 = vmul.f32 %v347, %v347
      %v364 = vmul.f32 %v348, %v348
      %v365 = vmul.f32 %v349, %v349
      %v366 = vmul.f32 %v350, %v350
      %v367 = vmul.f32 %v351, %v351
      %v368 = vmul.f32 %v352, %v352
      %v369 = vmul.f32 %v353, %v353
      %v370 = vmul.f32 %v354, %v354
      %v371 = vadd.f32 %v355, %v357
      %v372 = vadd.f32 %v371, %v359
      %v373 = vadd.f32 %v372, %v361
      %v374 = vadd.f32 %v373, %v363
      %v375 = vadd.f32 %v374, %v365
      %v376 = vadd.f32 %v375, %v367
      %v377 = vadd.f32 %v376, %v369
      %v378 = vrot.slane %v377, 4
      %v379 = vadd.f32 %v377, %v378
      %v380 = vrot.slane %v379, 2
      %v381 = vadd.f32 %v379, %v380
      %v382 = vrot.slane %v381, 1
      %v383 = vadd.f32 %v381, %v382
      %v384 = vadd.f32 %v356, %v358
      %v385 = vadd.f32 %v384, %v360
      %v386 = vadd.f32 %v385, %v362
      %v387 = vadd.f32 %v386, %v364
      %v388 = vadd.f32 %v387, %v366
      %v389 = vadd.f32 %v388, %v368
      %v390 = vadd.f32 %v389, %v370
      %v391 = vrot.slane %v390, 4
      %v392 = vadd.f32 %v390, %v391
      %v393 = vrot.slane %v392, 2
      %v394 = vadd.f32 %v392, %v393
      %v395 = vrot.slane %v394, 1
      %v396 = vadd.f32 %v394, %v395
      %v397 = vmax.f32 %v383, 1e-24
      %v398 = vmax.f32 %v396, 1e-24
      %v399 = vrsqrt.pop %v397
      %v400 = vrsqrt.pop %v398
      %v401 = vmul.f32 %v339, %v399
      %v402 = vmul.f32 %v340, %v400
      %v403 = vmul.f32 %v341, %v399
      %v404 = vmul.f32 %v342, %v400
      %v405 = vmul.f32 %v343, %v399
      %v406 = vmul.f32 %v344, %v400
      %v407 = vmul.f32 %v345, %v399
      %v408 = vmul.f32 %v346, %v400
      %v409 = vmul.f32 %v347, %v399
      %v410 = vmul.f32 %v348, %v400
      %v411 = vmul.f32 %v349, %v399
      %v412 = vmul.f32 %v350, %v400
      %v413 = vmul.f32 %v351, %v399
      %v414 = vmul.f32 %v352, %v400
      %v415 = vmul.f32 %v353, %v399
      %v416 = vmul.f32 %v354, %v400
      %v417 = vld [vmem:[%s1] sm:$0xff]
      %v418 = vld [vmem:[%s1 + $0x8] sm:$0xff]
      %v419 = vld [vmem:[%s1 + $0x10] sm:$0xff]
      %v420 = vld [vmem:[%s1 + $0x18] sm:$0xff]
      %v421 = vld [vmem:[%s1 + $0x20] sm:$0xff]
      %v422 = vld [vmem:[%s1 + $0x28] sm:$0xff]
      %v423 = vld [vmem:[%s1 + $0x30] sm:$0xff]
      %v424 = vld [vmem:[%s1 + $0x38] sm:$0xff]
      %426 = vset.pattern.permute.xlu0 0
      %427 = vperm.xlu0 %426, %v417
      %v428 = vpop.permute.xlu0 %427
      %431 = vset.pattern.permute.xlu0 0
      %432 = vperm.xlu0 %431, %v418
      %v433 = vpop.permute.xlu0 %432
      %436 = vset.pattern.permute.xlu0 0
      %437 = vperm.xlu0 %436, %v419
      %v438 = vpop.permute.xlu0 %437
      %441 = vset.pattern.permute.xlu0 0
      %442 = vperm.xlu0 %441, %v420
      %v443 = vpop.permute.xlu0 %442
      %446 = vset.pattern.permute.xlu0 0
      %447 = vperm.xlu0 %446, %v421
      %v448 = vpop.permute.xlu0 %447
      %451 = vset.pattern.permute.xlu0 0
      %452 = vperm.xlu0 %451, %v422
      %v453 = vpop.permute.xlu0 %452
      %456 = vset.pattern.permute.xlu0 0
      %457 = vperm.xlu0 %456, %v423
      %v458 = vpop.permute.xlu0 %457
      %461 = vset.pattern.permute.xlu0 0
      %462 = vperm.xlu0 %461, %v424
      %v463 = vpop.permute.xlu0 %462
      %v465 = vmul.f32 %v401, %v428
      %v466 = vmul.f32 %v402, %v428
      %v467 = vmul.f32 %v403, %v433
      %v468 = vmul.f32 %v404, %v433
      %v469 = vmul.f32 %v405, %v438
      %v470 = vmul.f32 %v406, %v438
      %v471 = vmul.f32 %v407, %v443
      %v472 = vmul.f32 %v408, %v443
      %v473 = vmul.f32 %v409, %v448
      %v474 = vmul.f32 %v410, %v448
      %v475 = vmul.f32 %v411, %v453
      %v476 = vmul.f32 %v412, %v453
      %v477 = vmul.f32 %v413, %v458
      %v478 = vmul.f32 %v414, %v458
      %v479 = vmul.f32 %v415, %v463
      %v480 = vmul.f32 %v416, %v463
      %v481 = vld [vmem:[%s2] sm:$0xf]
      %v482 = vld [vmem:[%s2 + $0x4] sm:$0xf]
      %v483 = vld [vmem:[%s2 + $0x8] sm:$0xf]
      %v484 = vld [vmem:[%s2 + $0xc] sm:$0xf]
      %v485 = vld [vmem:[%s2 + $0x10] sm:$0xf]
      %v486 = vld [vmem:[%s2 + $0x14] sm:$0xf]
      %v487 = vld [vmem:[%s2 + $0x18] sm:$0xf]
      %v488 = vld [vmem:[%s2 + $0x1c] sm:$0xf]
      %v489 = vld [vmem:[%s2 + $0x20] sm:$0xf]
      %v490 = vld [vmem:[%s2 + $0x24] sm:$0xf]
      %v491 = vld [vmem:[%s2 + $0x28] sm:$0xf]
      %v492 = vld [vmem:[%s2 + $0x2c] sm:$0xf]
      %v493 = vld [vmem:[%s2 + $0x30] sm:$0xf]
      %v494 = vld [vmem:[%s2 + $0x34] sm:$0xf]
      %v495 = vld [vmem:[%s2 + $0x38] sm:$0xf]
      %v496 = vld [vmem:[%s2 + $0x3c] sm:$0xf]
      %v497 = vld [vmem:[%s2 + $0x40] sm:$0xf]
      %v498 = vld [vmem:[%s2 + $0x44] sm:$0xf]
      %v499 = vld [vmem:[%s2 + $0x48] sm:$0xf]
      %v500 = vld [vmem:[%s2 + $0x4c] sm:$0xf]
      %v501 = vld [vmem:[%s2 + $0x50] sm:$0xf]
      %v502 = vld [vmem:[%s2 + $0x54] sm:$0xf]
      %v503 = vld [vmem:[%s2 + $0x58] sm:$0xf]
      %v504 = vld [vmem:[%s2 + $0x5c] sm:$0xf]
      %v505 = vld [vmem:[%s2 + $0x60] sm:$0xf]
      %v506 = vld [vmem:[%s2 + $0x64] sm:$0xf]
      %v507 = vld [vmem:[%s2 + $0x68] sm:$0xf]
      %v508 = vld [vmem:[%s2 + $0x6c] sm:$0xf]
      %v509 = vld [vmem:[%s2 + $0x70] sm:$0xf]
      %v510 = vld [vmem:[%s2 + $0x74] sm:$0xf]
      %v511 = vld [vmem:[%s2 + $0x78] sm:$0xf]
      %v512 = vld [vmem:[%s2 + $0x7c] sm:$0xf]
      %v513 = vld [vmem:[%s2 + $0x80] sm:$0xf]
      %v514 = vld [vmem:[%s2 + $0x84] sm:$0xf]
      %v515 = vld [vmem:[%s2 + $0x88] sm:$0xf]
      %v516 = vld [vmem:[%s2 + $0x8c] sm:$0xf]
      %v517 = vld [vmem:[%s2 + $0x90] sm:$0xf]
      %v518 = vld [vmem:[%s2 + $0x94] sm:$0xf]
      %v519 = vld [vmem:[%s2 + $0x98] sm:$0xf]
      %v520 = vld [vmem:[%s2 + $0x9c] sm:$0xf]
      %v521 = vld [vmem:[%s2 + $0xa0] sm:$0xf]
      %v522 = vld [vmem:[%s2 + $0xa4] sm:$0xf]
      %v523 = vld [vmem:[%s2 + $0xa8] sm:$0xf]
      %v524 = vld [vmem:[%s2 + $0xac] sm:$0xf]
      %v525 = vld [vmem:[%s2 + $0xb0] sm:$0xf]
      %v526 = vld [vmem:[%s2 + $0xb4] sm:$0xf]
      %v527 = vld [vmem:[%s2 + $0xb8] sm:$0xf]
      %v528 = vld [vmem:[%s2 + $0xbc] sm:$0xf]
      %v529 = vpack.c.bf16 %v467, %v465
      %v530 = vpack.c.bf16 %v468, %v466
      %v531 = vpack.c.bf16 %v471, %v469
      %v532 = vpack.c.bf16 %v472, %v470
      %v533 = vpack.c.bf16 %v475, %v473
      %v534 = vpack.c.bf16 %v476, %v474
      %v535 = vpack.c.bf16 %v479, %v477
      %v536 = vpack.c.bf16 %v480, %v478
      %v537 = vld [vmem:[%s327] sm:$0xff]
      %v538 = vld [vmem:[%s327 + $0x8] sm:$0xff]
      %v539 = vld [vmem:[%s327 + $0x10] sm:$0xff]
      %v540 = vld [vmem:[%s327 + $0x18] sm:$0xff]
      %v541 = vld [vmem:[%s327 + $0x20] sm:$0xff]
      %v542 = vld [vmem:[%s327 + $0x28] sm:$0xff]
      %v543 = vld [vmem:[%s327 + $0x30] sm:$0xff]
      %v544 = vld [vmem:[%s327 + $0x38] sm:$0xff]
      %v545 = vld [vmem:[%s327 + $0x40] sm:$0xff]
      %v546 = vld [vmem:[%s327 + $0x48] sm:$0xff]
      %v547 = vld [vmem:[%s327 + $0x50] sm:$0xff]
      %v548 = vld [vmem:[%s327 + $0x58] sm:$0xff]
      %v549 = vld [vmem:[%s327 + $0x60] sm:$0xff]
      %v550 = vld [vmem:[%s327 + $0x68] sm:$0xff]
      %v551 = vld [vmem:[%s327 + $0x70] sm:$0xff]
      %v552 = vld [vmem:[%s327 + $0x78] sm:$0xff]
      %v553 = vld [vmem:[%s327 + $0x80] sm:$0xff]
      %v554 = vld [vmem:[%s327 + $0x88] sm:$0xff]
      %v555 = vld [vmem:[%s327 + $0x90] sm:$0xff]
      %v556 = vld [vmem:[%s327 + $0x98] sm:$0xff]
      %v557 = vld [vmem:[%s327 + $0xa0] sm:$0xff]
      %v558 = vld [vmem:[%s327 + $0xa8] sm:$0xff]
      %v559 = vld [vmem:[%s327 + $0xb0] sm:$0xff]
      %v560 = vld [vmem:[%s327 + $0xb8] sm:$0xff]
      %v561 = vld [vmem:[%s327 + $0xc0] sm:$0xff]
      %v562 = vld [vmem:[%s327 + $0xc8] sm:$0xff]
      %v563 = vld [vmem:[%s327 + $0xd0] sm:$0xff]
      %v564 = vld [vmem:[%s327 + $0xd8] sm:$0xff]
      %v565 = vld [vmem:[%s327 + $0xe0] sm:$0xff]
      %v566 = vld [vmem:[%s327 + $0xe8] sm:$0xff]
      %v567 = vld [vmem:[%s327 + $0xf0] sm:$0xff]
      %v568 = vld [vmem:[%s327 + $0xf8] sm:$0xff]
      %v569 = vld [vmem:[%s327 + $0x100] sm:$0xff]
      %v570 = vld [vmem:[%s327 + $0x108] sm:$0xff]
      %v571 = vld [vmem:[%s327 + $0x110] sm:$0xff]
      %v572 = vld [vmem:[%s327 + $0x118] sm:$0xff]
      %v573 = vld [vmem:[%s327 + $0x120] sm:$0xff]
      %v574 = vld [vmem:[%s327 + $0x128] sm:$0xff]
      %v575 = vld [vmem:[%s327 + $0x130] sm:$0xff]
      %v576 = vld [vmem:[%s327 + $0x138] sm:$0xff]
      %v577 = vld [vmem:[%s327 + $0x140] sm:$0xff]
      %v578 = vld [vmem:[%s327 + $0x148] sm:$0xff]
      %v579 = vld [vmem:[%s327 + $0x150] sm:$0xff]
      %v580 = vld [vmem:[%s327 + $0x158] sm:$0xff]
      %v581 = vld [vmem:[%s327 + $0x160] sm:$0xff]
      %v582 = vld [vmem:[%s327 + $0x168] sm:$0xff]
      %v583 = vld [vmem:[%s327 + $0x170] sm:$0xff]
      %v584 = vld [vmem:[%s327 + $0x178] sm:$0xff]
      %586 = vset.pattern.permute.xlu0 0
      %587 = vperm.xlu0 %586, %v537
      %v588 = vpop.permute.xlu0 %587
      %591 = vset.pattern.permute.xlu0 0
      %592 = vperm.xlu0 %591, %v538
      %v593 = vpop.permute.xlu0 %592
      %596 = vset.pattern.permute.xlu0 0
      %597 = vperm.xlu0 %596, %v539
      %v598 = vpop.permute.xlu0 %597
      %601 = vset.pattern.permute.xlu0 0
      %602 = vperm.xlu0 %601, %v540
      %v603 = vpop.permute.xlu0 %602
      %606 = vset.pattern.permute.xlu0 0
      %607 = vperm.xlu0 %606, %v541
      %v608 = vpop.permute.xlu0 %607
      %611 = vset.pattern.permute.xlu0 0
      %612 = vperm.xlu0 %611, %v542
      %v613 = vpop.permute.xlu0 %612
      %616 = vset.pattern.permute.xlu0 0
      %617 = vperm.xlu0 %616, %v543
      %v618 = vpop.permute.xlu0 %617
      %621 = vset.pattern.permute.xlu0 0
      %622 = vperm.xlu0 %621, %v544
      %v623 = vpop.permute.xlu0 %622
      %626 = vset.pattern.permute.xlu0 0
      %627 = vperm.xlu0 %626, %v545
      %v628 = vpop.permute.xlu0 %627
      %631 = vset.pattern.permute.xlu0 0
      %632 = vperm.xlu0 %631, %v546
      %v633 = vpop.permute.xlu0 %632
      %636 = vset.pattern.permute.xlu0 0
      %637 = vperm.xlu0 %636, %v547
      %v638 = vpop.permute.xlu0 %637
      %641 = vset.pattern.permute.xlu0 0
      %642 = vperm.xlu0 %641, %v548
      %v643 = vpop.permute.xlu0 %642
      %646 = vset.pattern.permute.xlu0 0
      %647 = vperm.xlu0 %646, %v549
      %v648 = vpop.permute.xlu0 %647
      %651 = vset.pattern.permute.xlu0 0
      %652 = vperm.xlu0 %651, %v550
      %v653 = vpop.permute.xlu0 %652
      %656 = vset.pattern.permute.xlu0 0
      %657 = vperm.xlu0 %656, %v551
      %v658 = vpop.permute.xlu0 %657
      %661 = vset.pattern.permute.xlu0 0
      %662 = vperm.xlu0 %661, %v552
      %v663 = vpop.permute.xlu0 %662
      %666 = vset.pattern.permute.xlu0 0
      %667 = vperm.xlu0 %666, %v553
      %v668 = vpop.permute.xlu0 %667
      %671 = vset.pattern.permute.xlu0 0
      %672 = vperm.xlu0 %671, %v554
      %v673 = vpop.permute.xlu0 %672
      %676 = vset.pattern.permute.xlu0 0
      %677 = vperm.xlu0 %676, %v555
      %v678 = vpop.permute.xlu0 %677
      %681 = vset.pattern.permute.xlu0 0
      %682 = vperm.xlu0 %681, %v556
      %v683 = vpop.permute.xlu0 %682
      %686 = vset.pattern.permute.xlu0 0
      %687 = vperm.xlu0 %686, %v557
      %v688 = vpop.permute.xlu0 %687
      %691 = vset.pattern.permute.xlu0 0
      %692 = vperm.xlu0 %691, %v558
      %v693 = vpop.permute.xlu0 %692
      %696 = vset.pattern.permute.xlu0 0
      %697 = vperm.xlu0 %696, %v559
      %v698 = vpop.permute.xlu0 %697
      %701 = vset.pattern.permute.xlu0 0
      %702 = vperm.xlu0 %701, %v560
      %v703 = vpop.permute.xlu0 %702
      %706 = vset.pattern.permute.xlu0 0
      %707 = vperm.xlu0 %706, %v561
      %v708 = vpop.permute.xlu0 %707
      %711 = vset.pattern.permute.xlu0 0
      %712 = vperm.xlu0 %711, %v562
      %v713 = vpop.permute.xlu0 %712
      %716 = vset.pattern.permute.xlu0 0
      %717 = vperm.xlu0 %716, %v563
      %v718 = vpop.permute.xlu0 %717
      %721 = vset.pattern.permute.xlu0 0
      %722 = vperm.xlu0 %721, %v564
      %v723 = vpop.permute.xlu0 %722
      %726 = vset.pattern.permute.xlu0 0
      %727 = vperm.xlu0 %726, %v565
      %v728 = vpop.permute.xlu0 %727
      %731 = vset.pattern.permute.xlu0 0
      %732 = vperm.xlu0 %731, %v566
      %v733 = vpop.permute.xlu0 %732
      %736 = vset.pattern.permute.xlu0 0
      %737 = vperm.xlu0 %736, %v567
      %v738 = vpop.permute.xlu0 %737
      %741 = vset.pattern.permute.xlu0 0
      %742 = vperm.xlu0 %741, %v568
      %v743 = vpop.permute.xlu0 %742
      %746 = vset.pattern.permute.xlu0 0
      %747 = vperm.xlu0 %746, %v569
      %v748 = vpop.permute.xlu0 %747
      %751 = vset.pattern.permute.xlu0 0
      %752 = vperm.xlu0 %751, %v570
      %v753 = vpop.permute.xlu0 %752
      %756 = vset.pattern.permute.xlu0 0
      %757 = vperm.xlu0 %756, %v571
      %v758 = vpop.permute.xlu0 %757
      %761 = vset.pattern.permute.xlu0 0
      %762 = vperm.xlu0 %761, %v572
      %v763 = vpop.permute.xlu0 %762
      %766 = vset.pattern.permute.xlu0 0
      %767 = vperm.xlu0 %766, %v573
      %v768 = vpop.permute.xlu0 %767
      %771 = vset.pattern.permute.xlu0 0
      %772 = vperm.xlu0 %771, %v574
      %v773 = vpop.permute.xlu0 %772
      %776 = vset.pattern.permute.xlu0 0
      %777 = vperm.xlu0 %776, %v575
      %v778 = vpop.permute.xlu0 %777
      %781 = vset.pattern.permute.xlu0 0
      %782 = vperm.xlu0 %781, %v576
      %v783 = vpop.permute.xlu0 %782
      %786 = vset.pattern.permute.xlu0 0
      %787 = vperm.xlu0 %786, %v577
      %v788 = vpop.permute.xlu0 %787
      %791 = vset.pattern.permute.xlu0 0
      %792 = vperm.xlu0 %791, %v578
      %v793 = vpop.permute.xlu0 %792
      %796 = vset.pattern.permute.xlu0 0
      %797 = vperm.xlu0 %796, %v579
      %v798 = vpop.permute.xlu0 %797
      %801 = vset.pattern.permute.xlu0 0
      %802 = vperm.xlu0 %801, %v580
      %v803 = vpop.permute.xlu0 %802
      %806 = vset.pattern.permute.xlu0 0
      %807 = vperm.xlu0 %806, %v581
      %v808 = vpop.permute.xlu0 %807
      %811 = vset.pattern.permute.xlu0 0
      %812 = vperm.xlu0 %811, %v582
      %v813 = vpop.permute.xlu0 %812
      %816 = vset.pattern.permute.xlu0 0
      %817 = vperm.xlu0 %816, %v583
      %v818 = vpop.permute.xlu0 %817
      %821 = vset.pattern.permute.xlu0 0
      %822 = vperm.xlu0 %821, %v584
      %v823 = vpop.permute.xlu0 %822
      %v873 = vunpack.c.l.b16 %v481
      %v874 = vunpack.c.l.b16 %v482
      %v875 = vunpack.c.l.b16 %v483
      %v876 = vunpack.c.l.b16 %v484
      %v877 = vunpack.c.l.b16 %v485
      %v878 = vunpack.c.l.b16 %v486
      %v879 = vunpack.c.l.b16 %v487
      %v880 = vunpack.c.l.b16 %v488
      %v881 = vunpack.c.l.b16 %v489
      %v882 = vunpack.c.l.b16 %v490
      %v883 = vunpack.c.l.b16 %v491
      %v884 = vunpack.c.l.b16 %v492
      %v885 = vunpack.c.l.b16 %v493
      %v886 = vunpack.c.l.b16 %v494
      %v887 = vunpack.c.l.b16 %v495
      %v888 = vunpack.c.l.b16 %v496
      %v889 = vunpack.c.l.b16 %v497
      %v890 = vunpack.c.l.b16 %v498
      %v891 = vunpack.c.l.b16 %v499
      %v892 = vunpack.c.l.b16 %v500
      %v893 = vunpack.c.l.b16 %v501
      %v894 = vunpack.c.l.b16 %v502
      %v895 = vunpack.c.l.b16 %v503
      %v896 = vunpack.c.l.b16 %v504
      %v897 = vunpack.c.l.b16 %v505
      %v898 = vunpack.c.l.b16 %v506
      %v899 = vunpack.c.l.b16 %v507
      %v900 = vunpack.c.l.b16 %v508
      %v901 = vunpack.c.l.b16 %v509
      %v902 = vunpack.c.l.b16 %v510
      %v903 = vunpack.c.l.b16 %v511
      %v904 = vunpack.c.l.b16 %v512
      %v905 = vunpack.c.l.b16 %v513
      %v906 = vunpack.c.l.b16 %v514
      %v907 = vunpack.c.l.b16 %v515
      %v908 = vunpack.c.l.b16 %v516
      %v909 = vunpack.c.l.b16 %v517
      %v910 = vunpack.c.l.b16 %v518
      %v911 = vunpack.c.l.b16 %v519
      %v912 = vunpack.c.l.b16 %v520
      %v913 = vunpack.c.l.b16 %v521
      %v914 = vunpack.c.l.b16 %v522
      %v915 = vunpack.c.l.b16 %v523
      %v916 = vunpack.c.l.b16 %v524
      %v917 = vunpack.c.l.b16 %v525
      %v918 = vunpack.c.l.b16 %v526
      %v919 = vunpack.c.l.b16 %v527
      %v920 = vunpack.c.l.b16 %v528
      %v921 = vpack.c.b16 %v874, %v873
      %v922 = vpack.c.b16 %v876, %v875
      %v923 = vpack.c.b16 %v878, %v877
      %v924 = vpack.c.b16 %v880, %v879
      %v925 = vpack.c.b16 %v882, %v881
      %v926 = vpack.c.b16 %v884, %v883
      %v927 = vpack.c.b16 %v886, %v885
      %v928 = vpack.c.b16 %v888, %v887
      %v929 = vpack.c.b16 %v890, %v889
      %v930 = vpack.c.b16 %v892, %v891
      %v931 = vpack.c.b16 %v894, %v893
      %v932 = vpack.c.b16 %v896, %v895
      %v933 = vpack.c.b16 %v898, %v897
      %v934 = vpack.c.b16 %v900, %v899
      %v935 = vpack.c.b16 %v902, %v901
      %v936 = vpack.c.b16 %v904, %v903
      %v937 = vpack.c.b16 %v906, %v905
      %v938 = vpack.c.b16 %v908, %v907
      %v939 = vpack.c.b16 %v910, %v909
      %v940 = vpack.c.b16 %v912, %v911
      %v941 = vpack.c.b16 %v914, %v913
      %v942 = vpack.c.b16 %v916, %v915
      %v943 = vpack.c.b16 %v918, %v917
      %v944 = vpack.c.b16 %v920, %v919
      %vm945 = vcmask 523264
      %v947 = vsel %vm945, %v921, 0
      %v950 = vsel %vm945, %v922, 0
      %v953 = vsel %vm945, %v923, 0
      %v956 = vsel %vm945, %v924, 0
      %v959 = vsel %vm945, %v925, 0
      %v962 = vsel %vm945, %v926, 0
      %v965 = vsel %vm945, %v927, 0
      %v968 = vsel %vm945, %v928, 0
      %v971 = vsel %vm945, %v929, 0
      %v974 = vsel %vm945, %v930, 0
      %v977 = vsel %vm945, %v931, 0
      %v980 = vsel %vm945, %v932, 0
      %v983 = vsel %vm945, %v933, 0
      %v986 = vsel %vm945, %v934, 0
      %v989 = vsel %vm945, %v935, 0
      %v992 = vsel %vm945, %v936, 0
      %v995 = vsel %vm945, %v937, 0
      %v998 = vsel %vm945, %v938, 0
      %v1001 = vsel %vm945, %v939, 0
      %v1004 = vsel %vm945, %v940, 0
      %v1007 = vsel %vm945, %v941, 0
      %v1010 = vsel %vm945, %v942, 0
      %v1013 = vsel %vm945, %v943, 0
      %v1016 = vsel %vm945, %v944, 0
      %1018 = vmatprep.subr.bf16.mxu0 %v530
      %1019 = vmatpush1.bf16.msra.mxu0 %v529
      %1020 = vmatprep.subr.bf16.mxu0 %v532
      %1021 = vmatpush1.bf16.msra.mxu0 %v531
      %1022 = vmatprep.subr.bf16.mxu0 %v534
      %1023 = vmatpush1.bf16.msra.mxu0 %v533
      %1024 = vmatprep.subr.bf16.mxu0 %v536
      %1025 = vmatpush1.bf16.msra.mxu0 %v535
      %1026 = vmatprep.subr.bf16.mxu0 0
      %1027 = vmatpush1.bf16.msra.mxu0 0
      %1028 = vmatprep.subr.bf16.mxu0 0
      %1029 = vmatpush1.bf16.msra.mxu0 0
      %1030 = vmatprep.subr.bf16.mxu0 0
      %1031 = vmatpush1.bf16.msra.mxu0 0
      %1032 = vmatprep.subr.bf16.mxu0 0
      %1033 = vmatpush1.bf16.msra.mxu0 0
      %1034 = vmatprep.subr.bf16.mxu0 0
      %1035 = vmatpush1.bf16.msra.mxu0 0
      %1036 = vmatprep.subr.bf16.mxu0 0
      %1037 = vmatpush1.bf16.msra.mxu0 0
      %1038 = vmatprep.subr.bf16.mxu0 0
      %1039 = vmatpush1.bf16.msra.mxu0 0
      %1040 = vmatprep.subr.bf16.mxu0 0
      %1041 = vmatpush1.bf16.msra.mxu0 0
      %1042 = vmatprep.subr.bf16.mxu0 0
      %1043 = vmatpush1.bf16.msra.mxu0 0
      %1044 = vmatprep.subr.bf16.mxu0 0
      %1045 = vmatpush1.bf16.msra.mxu0 0
      %1046 = vmatprep.subr.bf16.mxu0 0
      %1047 = vmatpush1.bf16.msra.mxu0 0
      %1048 = vmatprep.subr.bf16.mxu0 0
      %1049 = vmatpush1.bf16.msra.mxu0 0
      %1050 = vmatprep.mubr.bf16.mxu0 0
      %1051 = vmatmul.mubr.bf16.gmra.mrb[0].mxu0 %v947
      %v1052 = vpop.f32.mrb[0].mxu0
      %v1053 = vadd.f32 %v588, %v1052
      %v1054 = vpop.f32.mrb[0].mxu0
      %v1055 = vadd.f32 %v588, %v1054
      %v1056 = vpop.f32.mrb[0].mxu0
      %v1057 = vadd.f32 %v593, %v1056
      %v1058 = vpop.f32.mrb[0].mxu0
      %v1059 = vadd.f32 %v593, %v1058
      %1060 = vmatprep.mubr.bf16.mxu0 0
      %1061 = vmatmul.mubr.bf16.gmra.mrb[0].mxu0 %v950
      %v1062 = vpop.f32.mrb[0].mxu0
      %v1063 = vadd.f32 %v598, %v1062
      %v1064 = vpop.f32.mrb[0].mxu0
      %v1065 = vadd.f32 %v598, %v1064
      %v1066 = vpop.f32.mrb[0].mxu0
      %v1067 = vadd.f32 %v603, %v1066
      %v1068 = vpop.f32.mrb[0].mxu0
      %v1069 = vadd.f32 %v603, %v1068
      %1070 = vmatprep.mubr.bf16.mxu0 0
      %1071 = vmatmul.mubr.bf16.gmra.mrb[0].mxu0 %v953
      %v1072 = vpop.f32.mrb[0].mxu0
      %v1073 = vadd.f32 %v608, %v1072
      %v1074 = vpop.f32.mrb[0].mxu0
      %v1075 = vadd.f32 %v608, %v1074
      %v1076 = vpop.f32.mrb[0].mxu0
      %v1077 = vadd.f32 %v613, %v1076
      %v1078 = vpop.f32.mrb[0].mxu0
      %v1079 = vadd.f32 %v613, %v1078
      %1080 = vmatprep.mubr.bf16.mxu0 0
      %1081 = vmatmul.mubr.bf16.gmra.mrb[0].mxu0 %v956
      %v1082 = vpop.f32.mrb[0].mxu0
      %v1083 = vadd.f32 %v618, %v1082
      %v1084 = vpop.f32.mrb[0].mxu0
      %v1085 = vadd.f32 %v618, %v1084
      %v1086 = vpop.f32.mrb[0].mxu0
      %v1087 = vadd.f32 %v623, %v1086
      %v1088 = vpop.f32.mrb[0].mxu0
      %v1089 = vadd.f32 %v623, %v1088
      %1090 = vmatprep.mubr.bf16.mxu0 0
      %1091 = vmatmul.mubr.bf16.gmra.mrb[0].mxu0 %v959
      %v1092 = vpop.f32.mrb[0].mxu0
      %v1093 = vadd.f32 %v628, %v1092
      %v1094 = vpop.f32.mrb[0].mxu0
      %v1095 = vadd.f32 %v628, %v1094
      %v1096 = vpop.f32.mrb[0].mxu0
      %v1097 = vadd.f32 %v633, %v1096
      %v1098 = vpop.f32.mrb[0].mxu0
      %v1099 = vadd.f32 %v633, %v1098
      %1100 = vmatprep.mubr.bf16.mxu0 0
      %1101 = vmatmul.mubr.bf16.gmra.mrb[0].mxu0 %v962
      %v1102 = vpop.f32.mrb[0].mxu0
      %v1103 = vadd.f32 %v638, %v1102
      %v1104 = vpop.f32.mrb[0].mxu0
      %v1105 = vadd.f32 %v638, %v1104
      %v1106 = vpop.f32.mrb[0].mxu0
      %v1107 = vadd.f32 %v643, %v1106
      %v1108 = vpop.f32.mrb[0].mxu0
      %v1109 = vadd.f32 %v643, %v1108
      %1110 = vmatprep.mubr.bf16.mxu0 0
      %1111 = vmatmul.mubr.bf16.gmra.mrb[0].mxu0 %v965
      %v1112 = vpop.f32.mrb[0].mxu0
      %v1113 = vadd.f32 %v648, %v1112
      %v1114 = vpop.f32.mrb[0].mxu0
      %v1115 = vadd.f32 %v648, %v1114
      %v1116 = vpop.f32.mrb[0].mxu0
      %v1117 = vadd.f32 %v653, %v1116
      %v1118 = vpop.f32.mrb[0].mxu0
      %v1119 = vadd.f32 %v653, %v1118
      %1120 = vmatprep.mubr.bf16.mxu0 0
      %1121 = vmatmul.mubr.bf16.gmra.mrb[0].mxu0 %v968
      %v1122 = vpop.f32.mrb[0].mxu0
      %v1123 = vadd.f32 %v658, %v1122
      %v1124 = vpop.f32.mrb[0].mxu0
      %v1125 = vadd.f32 %v658, %v1124
      %v1126 = vpop.f32.mrb[0].mxu0
      %v1127 = vadd.f32 %v663, %v1126
      %v1128 = vpop.f32.mrb[0].mxu0
      %v1129 = vadd.f32 %v663, %v1128
      %1130 = vmatprep.mubr.bf16.mxu0 0
      %1131 = vmatmul.mubr.bf16.gmra.mrb[0].mxu0 %v971
      %v1132 = vpop.f32.mrb[0].mxu0
      %v1133 = vadd.f32 %v668, %v1132
      %v1134 = vpop.f32.mrb[0].mxu0
      %v1135 = vadd.f32 %v668, %v1134
      %v1136 = vpop.f32.mrb[0].mxu0
      %v1137 = vadd.f32 %v673, %v1136
      %v1138 = vpop.f32.mrb[0].mxu0
      %v1139 = vadd.f32 %v673, %v1138
      %1140 = vmatprep.mubr.bf16.mxu0 0
      %1141 = vmatmul.mubr.bf16.gmra.mrb[0].mxu0 %v974
      %v1142 = vpop.f32.mrb[0].mxu0
      %v1143 = vadd.f32 %v678, %v1142
      %v1144 = vpop.f32.mrb[0].mxu0
      %v1145 = vadd.f32 %v678, %v1144
      %v1146 = vpop.f32.mrb[0].mxu0
      %v1147 = vadd.f32 %v683, %v1146
      %v1148 = vpop.f32.mrb[0].mxu0
      %v1149 = vadd.f32 %v683, %v1148
      %1150 = vmatprep.mubr.bf16.mxu0 0
      %1151 = vmatmul.mubr.bf16.gmra.mrb[0].mxu0 %v977
      %v1152 = vpop.f32.mrb[0].mxu0
      %v1153 = vadd.f32 %v688, %v1152
      %v1154 = vpop.f32.mrb[0].mxu0
      %v1155 = vadd.f32 %v688, %v1154
      %v1156 = vpop.f32.mrb[0].mxu0
      %v1157 = vadd.f32 %v693, %v1156
      %v1158 = vpop.f32.mrb[0].mxu0
      %v1159 = vadd.f32 %v693, %v1158
      %1160 = vmatprep.mubr.bf16.mxu0 0
      %1161 = vmatmul.mubr.bf16.gmra.mrb[0].mxu0 %v980
      %v1162 = vpop.f32.mrb[0].mxu0
      %v1163 = vadd.f32 %v698, %v1162
      %v1164 = vpop.f32.mrb[0].mxu0
      %v1165 = vadd.f32 %v698, %v1164
      %v1166 = vpop.f32.mrb[0].mxu0
      %v1167 = vadd.f32 %v703, %v1166
      %v1168 = vpop.f32.mrb[0].mxu0
      %v1169 = vadd.f32 %v703, %v1168
      %1170 = vmatprep.mubr.bf16.mxu0 0
      %1171 = vmatmul.mubr.bf16.gmra.mrb[0].mxu0 %v983
      %v1172 = vpop.f32.mrb[0].mxu0
      %v1173 = vadd.f32 %v708, %v1172
      %v1174 = vpop.f32.mrb[0].mxu0
      %v1175 = vadd.f32 %v708, %v1174
      %v1176 = vpop.f32.mrb[0].mxu0
      %v1177 = vadd.f32 %v713, %v1176
      %v1178 = vpop.f32.mrb[0].mxu0
      %v1179 = vadd.f32 %v713, %v1178
      %1180 = vmatprep.mubr.bf16.mxu0 0
      %1181 = vmatmul.mubr.bf16.gmra.mrb[0].mxu0 %v986
      %v1182 = vpop.f32.mrb[0].mxu0
      %v1183 = vadd.f32 %v718, %v1182
      %v1184 = vpop.f32.mrb[0].mxu0
      %v1185 = vadd.f32 %v718, %v1184
      %v1186 = vpop.f32.mrb[0].mxu0
      %v1187 = vadd.f32 %v723, %v1186
      %v1188 = vpop.f32.mrb[0].mxu0
      %v1189 = vadd.f32 %v723, %v1188
      %1190 = vmatprep.mubr.bf16.mxu0 0
      %1191 = vmatmul.mubr.bf16.gmra.mrb[0].mxu0 %v989
      %v1192 = vpop.f32.mrb[0].mxu0
      %v1193 = vadd.f32 %v728, %v1192
      %v1194 = vpop.f32.mrb[0].mxu0
      %v1195 = vadd.f32 %v728, %v1194
      %v1196 = vpop.f32.mrb[0].mxu0
      %v1197 = vadd.f32 %v733, %v1196
      %v1198 = vpop.f32.mrb[0].mxu0
      %v1199 = vadd.f32 %v733, %v1198
      %1200 = vmatprep.mubr.bf16.mxu0 0
      %1201 = vmatmul.mubr.bf16.gmra.mrb[0].mxu0 %v992
      %v1202 = vpop.f32.mrb[0].mxu0
      %v1203 = vadd.f32 %v738, %v1202
      %v1204 = vpop.f32.mrb[0].mxu0
      %v1205 = vadd.f32 %v738, %v1204
      %v1206 = vpop.f32.mrb[0].mxu0
      %v1207 = vadd.f32 %v743, %v1206
      %v1208 = vpop.f32.mrb[0].mxu0
      %v1209 = vadd.f32 %v743, %v1208
      %1210 = vmatprep.mubr.bf16.mxu0 0
      %1211 = vmatmul.mubr.bf16.gmra.mrb[0].mxu0 %v995
      %v1212 = vpop.f32.mrb[0].mxu0
      %v1213 = vadd.f32 %v748, %v1212
      %v1214 = vpop.f32.mrb[0].mxu0
      %v1215 = vadd.f32 %v748, %v1214
      %v1216 = vpop.f32.mrb[0].mxu0
      %v1217 = vadd.f32 %v753, %v1216
      %v1218 = vpop.f32.mrb[0].mxu0
      %v1219 = vadd.f32 %v753, %v1218
      %1220 = vmatprep.mubr.bf16.mxu0 0
      %1221 = vmatmul.mubr.bf16.gmra.mrb[0].mxu0 %v998
      %v1222 = vpop.f32.mrb[0].mxu0
      %v1223 = vadd.f32 %v758, %v1222
      %v1224 = vpop.f32.mrb[0].mxu0
      %v1225 = vadd.f32 %v758, %v1224
      %v1226 = vpop.f32.mrb[0].mxu0
      %v1227 = vadd.f32 %v763, %v1226
      %v1228 = vpop.f32.mrb[0].mxu0
      %v1229 = vadd.f32 %v763, %v1228
      %1230 = vmatprep.mubr.bf16.mxu0 0
      %1231 = vmatmul.mubr.bf16.gmra.mrb[0].mxu0 %v1001
      %v1232 = vpop.f32.mrb[0].mxu0
      %v1233 = vadd.f32 %v768, %v1232
      %v1234 = vpop.f32.mrb[0].mxu0
      %v1235 = vadd.f32 %v768, %v1234
      %v1236 = vpop.f32.mrb[0].mxu0
      %v1237 = vadd.f32 %v773, %v1236
      %v1238 = vpop.f32.mrb[0].mxu0
      %v1239 = vadd.f32 %v773, %v1238
      %1240 = vmatprep.mubr.bf16.mxu0 0
      %1241 = vmatmul.mubr.bf16.gmra.mrb[0].mxu0 %v1004
      %v1242 = vpop.f32.mrb[0].mxu0
      %v1243 = vadd.f32 %v778, %v1242
      %v1244 = vpop.f32.mrb[0].mxu0
      %v1245 = vadd.f32 %v778, %v1244
      %v1246 = vpop.f32.mrb[0].mxu0
      %v1247 = vadd.f32 %v783, %v1246
      %v1248 = vpop.f32.mrb[0].mxu0
      %v1249 = vadd.f32 %v783, %v1248
      %1250 = vmatprep.mubr.bf16.mxu0 0
      %1251 = vmatmul.mubr.bf16.gmra.mrb[0].mxu0 %v1007
      %v1252 = vpop.f32.mrb[0].mxu0
      %v1253 = vadd.f32 %v788, %v1252
      %v1254 = vpop.f32.mrb[0].mxu0
      %v1255 = vadd.f32 %v788, %v1254
      %v1256 = vpop.f32.mrb[0].mxu0
      %v1257 = vadd.f32 %v793, %v1256
      %v1258 = vpop.f32.mrb[0].mxu0
      %v1259 = vadd.f32 %v793, %v1258
      %1260 = vmatprep.mubr.bf16.mxu0 0
      %1261 = vmatmul.mubr.bf16.gmra.mrb[0].mxu0 %v1010
      %v1262 = vpop.f32.mrb[0].mxu0
      %v1263 = vadd.f32 %v798, %v1262
      %v1264 = vpop.f32.mrb[0].mxu0
      %v1265 = vadd.f32 %v798, %v1264
      %v1266 = vpop.f32.mrb[0].mxu0
      %v1267 = vadd.f32 %v803, %v1266
      %v1268 = vpop.f32.mrb[0].mxu0
      %v1269 = vadd.f32 %v803, %v1268
      %1270 = vmatprep.mubr.bf16.mxu0 0
      %1271 = vmatmul.mubr.bf16.gmra.mrb[0].mxu0 %v1013
      %v1272 = vpop.f32.mrb[0].mxu0
      %v1273 = vadd.f32 %v808, %v1272
      %v1274 = vpop.f32.mrb[0].mxu0
      %v1275 = vadd.f32 %v808, %v1274
      %v1276 = vpop.f32.mrb[0].mxu0
      %v1277 = vadd.f32 %v813, %v1276
      %v1278 = vpop.f32.mrb[0].mxu0
      %v1279 = vadd.f32 %v813, %v1278
      %1280 = vmatprep.mubr.bf16.mxu0 0
      %1281 = vmatmul.mubr.bf16.gmra.mrb[0].mxu0 %v1016
      %v1282 = vpop.f32.mrb[0].mxu0
      %v1283 = vadd.f32 %v818, %v1282
      %v1284 = vpop.f32.mrb[0].mxu0
      %v1285 = vadd.f32 %v818, %v1284
      %v1286 = vpop.f32.mrb[0].mxu0
      %v1287 = vadd.f32 %v823, %v1286
      %v1288 = vpop.f32.mrb[0].mxu0
      %v1289 = vadd.f32 %v823, %v1288
      %1290 = vdwg.mxu0
      %v1291 = vmul.f32 %v1053, 0.17677669
      %v1292 = vmul.f32 %v1055, 0.17677669
      %v1293 = vmul.f32 %v1057, 0.17677669
      %v1294 = vmul.f32 %v1059, 0.17677669
      %v1295 = vmul.f32 %v1063, 0.17677669
      %v1296 = vmul.f32 %v1065, 0.17677669
      %v1297 = vmul.f32 %v1067, 0.17677669
      %v1298 = vmul.f32 %v1069, 0.17677669
      %v1299 = vmul.f32 %v1073, 0.17677669
      %v1300 = vmul.f32 %v1075, 0.17677669
      %v1301 = vmul.f32 %v1077, 0.17677669
      %v1302 = vmul.f32 %v1079, 0.17677669
      %v1303 = vmul.f32 %v1083, 0.17677669
      %v1304 = vmul.f32 %v1085, 0.17677669
      %v1305 = vmul.f32 %v1087, 0.17677669
      %v1306 = vmul.f32 %v1089, 0.17677669
      %v1307 = vmul.f32 %v1093, 0.17677669
      %v1308 = vmul.f32 %v1095, 0.17677669
      %v1309 = vmul.f32 %v1097, 0.17677669
      %v1310 = vmul.f32 %v1099, 0.17677669
      %v1311 = vmul.f32 %v1103, 0.17677669
      %v1312 = vmul.f32 %v1105, 0.17677669
      %v1313 = vmul.f32 %v1107, 0.17677669
      %v1314 = vmul.f32 %v1109, 0.17677669
      %v1315 = vmul.f32 %v1113, 0.17677669
      %v1316 = vmul.f32 %v1115, 0.17677669
      %v1317 = vmul.f32 %v1117, 0.17677669
      %v1318 = vmul.f32 %v1119, 0.17677669
      %v1319 = vmul.f32 %v1123, 0.17677669
      %v1320 = vmul.f32 %v1125, 0.17677669
      %v1321 = vmul.f32 %v1127, 0.17677669
      %v1322 = vmul.f32 %v1129, 0.17677669
      %v1323 = vld [vmem:[%s6] sm:$0xf]
      %v1324 = vld [vmem:[%s6 + $0x4] sm:$0xf]
      %v1325 = vld [vmem:[%s6 + $0x8] sm:$0xf]
      %v1326 = vld [vmem:[%s6 + $0xc] sm:$0xf]
      %v1327 = vld [vmem:[%s6 + $0x10] sm:$0xf]
      %v1328 = vld [vmem:[%s6 + $0x14] sm:$0xf]
      %v1329 = vld [vmem:[%s6 + $0x18] sm:$0xf]
      %v1330 = vld [vmem:[%s6 + $0x1c] sm:$0xf]
      %v1331 = vld [vmem:[%s6 + $0x20] sm:$0xf]
      %v1332 = vld [vmem:[%s6 + $0x24] sm:$0xf]
      %v1333 = vld [vmem:[%s6 + $0x28] sm:$0xf]
      %v1334 = vld [vmem:[%s6 + $0x2c] sm:$0xf]
      %v1335 = vld [vmem:[%s6 + $0x30] sm:$0xf]
      %v1336 = vld [vmem:[%s6 + $0x34] sm:$0xf]
      %v1337 = vld [vmem:[%s6 + $0x38] sm:$0xf]
      %v1338 = vld [vmem:[%s6 + $0x3c] sm:$0xf]
      %v1339 = vmul.f32 %v1291, %v1133
      %v1340 = vmul.f32 %v1292, %v1135
      %v1341 = vmul.f32 %v1293, %v1137
      %v1342 = vmul.f32 %v1294, %v1139
      %v1343 = vmul.f32 %v1295, %v1143
      %v1344 = vmul.f32 %v1296, %v1145
      %v1345 = vmul.f32 %v1297, %v1147
      %v1346 = vmul.f32 %v1298, %v1149
      %v1347 = vmul.f32 %v1299, %v1153
      %v1348 = vmul.f32 %v1300, %v1155
      %v1349 = vmul.f32 %v1301, %v1157
      %v1350 = vmul.f32 %v1302, %v1159
      %v1351 = vmul.f32 %v1303, %v1163
      %v1352 = vmul.f32 %v1304, %v1165
      %v1353 = vmul.f32 %v1305, %v1167
      %v1354 = vmul.f32 %v1306, %v1169
      %v1355 = vmul.f32 %v1307, %v1173
      %v1356 = vmul.f32 %v1308, %v1175
      %v1357 = vmul.f32 %v1309, %v1177
      %v1358 = vmul.f32 %v1310, %v1179
      %v1359 = vmul.f32 %v1311, %v1183
      %v1360 = vmul.f32 %v1312, %v1185
      %v1361 = vmul.f32 %v1313, %v1187
      %v1362 = vmul.f32 %v1314, %v1189
      %v1363 = vmul.f32 %v1315, %v1193
      %v1364 = vmul.f32 %v1316, %v1195
      %v1365 = vmul.f32 %v1317, %v1197
      %v1366 = vmul.f32 %v1318, %v1199
      %v1367 = vmul.f32 %v1319, %v1203
      %v1368 = vmul.f32 %v1320, %v1205
      %v1369 = vmul.f32 %v1321, %v1207
      %v1370 = vmul.f32 %v1322, %v1209
      %v1371 = vpack.c.bf16 %v1341, %v1339
      %v1372 = vpack.c.bf16 %v1342, %v1340
      %v1373 = vpack.c.bf16 %v1345, %v1343
      %v1374 = vpack.c.bf16 %v1346, %v1344
      %v1375 = vpack.c.bf16 %v1349, %v1347
      %v1376 = vpack.c.bf16 %v1350, %v1348
      %v1377 = vpack.c.bf16 %v1353, %v1351
      %v1378 = vpack.c.bf16 %v1354, %v1352
      %v1379 = vpack.c.bf16 %v1357, %v1355
      %v1380 = vpack.c.bf16 %v1358, %v1356
      %v1381 = vpack.c.bf16 %v1361, %v1359
      %v1382 = vpack.c.bf16 %v1362, %v1360
      %v1383 = vpack.c.bf16 %v1365, %v1363
      %v1384 = vpack.c.bf16 %v1366, %v1364
      %v1385 = vpack.c.bf16 %v1369, %v1367
      %v1386 = vpack.c.bf16 %v1370, %v1368
      %v1403 = vunpack.c.l.b16 %v1323
      %v1404 = vunpack.c.l.b16 %v1324
      %v1405 = vunpack.c.l.b16 %v1325
      %v1406 = vunpack.c.l.b16 %v1326
      %v1407 = vunpack.c.l.b16 %v1327
      %v1408 = vunpack.c.l.b16 %v1328
      %v1409 = vunpack.c.l.b16 %v1329
      %v1410 = vunpack.c.l.b16 %v1330
      %v1411 = vunpack.c.l.b16 %v1331
      %v1412 = vunpack.c.l.b16 %v1332
      %v1413 = vunpack.c.l.b16 %v1333
      %v1414 = vunpack.c.l.b16 %v1334
      %v1415 = vunpack.c.l.b16 %v1335
      %v1416 = vunpack.c.l.b16 %v1336
      %v1417 = vunpack.c.l.b16 %v1337
      %v1418 = vunpack.c.l.b16 %v1338
      %v1419 = vpack.c.b16 %v1404, %v1403
      %v1420 = vpack.c.b16 %v1406, %v1405
      %v1421 = vpack.c.b16 %v1408, %v1407
      %v1422 = vpack.c.b16 %v1410, %v1409
      %v1423 = vpack.c.b16 %v1412, %v1411
      %v1424 = vpack.c.b16 %v1414, %v1413
      %v1425 = vpack.c.b16 %v1416, %v1415
      %v1426 = vpack.c.b16 %v1418, %v1417
      %1435 = vmatprep.subr.bf16.mxu0 %v1372
      %1436 = vmatpush1.bf16.msra.mxu0 %v1371
      %1437 = vmatprep.subr.bf16.mxu0 %v1374
      %1438 = vmatpush1.bf16.msra.mxu0 %v1373
      %1439 = vmatprep.subr.bf16.mxu0 %v1376
      %1440 = vmatpush1.bf16.msra.mxu0 %v1375
      %1441 = vmatprep.subr.bf16.mxu0 %v1378
      %1442 = vmatpush1.bf16.msra.mxu0 %v1377
      %1443 = vmatprep.subr.bf16.mxu0 %v1380
      %1444 = vmatpush1.bf16.msra.mxu0 %v1379
      %1445 = vmatprep.subr.bf16.mxu0 %v1382
      %1446 = vmatpush1.bf16.msra.mxu0 %v1381
      %1447 = vmatprep.subr.bf16.mxu0 %v1384
      %1448 = vmatpush1.bf16.msra.mxu0 %v1383
      %1449 = vmatprep.subr.bf16.mxu0 %v1386
      %1450 = vmatpush1.bf16.msra.mxu0 %v1385
      %1451 = vmatprep.subr.bf16.mxu0 0
      %1452 = vmatpush1.bf16.msra.mxu0 0
      %1453 = vmatprep.subr.bf16.mxu0 0
      %1454 = vmatpush1.bf16.msra.mxu0 0
      %1455 = vmatprep.subr.bf16.mxu0 0
      %1456 = vmatpush1.bf16.msra.mxu0 0
      %1457 = vmatprep.subr.bf16.mxu0 0
      %1458 = vmatpush1.bf16.msra.mxu0 0
      %1459 = vmatprep.subr.bf16.mxu0 0
      %1460 = vmatpush1.bf16.msra.mxu0 0
      %1461 = vmatprep.subr.bf16.mxu0 0
      %1462 = vmatpush1.bf16.msra.mxu0 0
      %1463 = vmatprep.subr.bf16.mxu0 0
      %1464 = vmatpush1.bf16.msra.mxu0 0
      %1465 = vmatprep.subr.bf16.mxu0 0
      %1466 = vmatpush1.bf16.msra.mxu0 0
      %1467 = vmatprep.mubr.bf16.mxu0 0
      %1468 = vmatmul.mubr.bf16.gmra.mrb[0].mxu0 %v1419
      %v1469 = vpop.f32.mrb[0].mxu0
      %v1470 = vadd.f32 0.0, %v1469
      %v1471 = vpop.f32.mrb[0].mxu0
      %v1472 = vadd.f32 0.0, %v1471
      %v1473 = vpop.f32.mrb[0].mxu0
      %v1474 = vadd.f32 0.0, %v1473
      %v1475 = vpop.f32.mrb[0].mxu0
      %v1476 = vadd.f32 0.0, %v1475
      %1477 = vmatprep.mubr.bf16.mxu0 0
      %1478 = vmatmul.mubr.bf16.gmra.mrb[0].mxu0 %v1420
      %v1479 = vpop.f32.mrb[0].mxu0
      %v1480 = vadd.f32 0.0, %v1479
      %v1481 = vpop.f32.mrb[0].mxu0
      %v1482 = vadd.f32 0.0, %v1481
      %v1483 = vpop.f32.mrb[0].mxu0
      %v1484 = vadd.f32 0.0, %v1483
      %v1485 = vpop.f32.mrb[0].mxu0
      %v1486 = vadd.f32 0.0, %v1485
      %1487 = vmatprep.mubr.bf16.mxu0 0
      %1488 = vmatmul.mubr.bf16.gmra.mrb[0].mxu0 %v1421
      %v1489 = vpop.f32.mrb[0].mxu0
      %v1490 = vadd.f32 0.0, %v1489
      %v1491 = vpop.f32.mrb[0].mxu0
      %v1492 = vadd.f32 0.0, %v1491
      %v1493 = vpop.f32.mrb[0].mxu0
      %v1494 = vadd.f32 0.0, %v1493
      %v1495 = vpop.f32.mrb[0].mxu0
      %v1496 = vadd.f32 0.0, %v1495
      %1497 = vmatprep.mubr.bf16.mxu0 0
      %1498 = vmatmul.mubr.bf16.gmra.mrb[0].mxu0 %v1422
      %v1499 = vpop.f32.mrb[0].mxu0
      %v1500 = vadd.f32 0.0, %v1499
      %v1501 = vpop.f32.mrb[0].mxu0
      %v1502 = vadd.f32 0.0, %v1501
      %v1503 = vpop.f32.mrb[0].mxu0
      %v1504 = vadd.f32 0.0, %v1503
      %v1505 = vpop.f32.mrb[0].mxu0
      %v1506 = vadd.f32 0.0, %v1505
      %1507 = vmatprep.mubr.bf16.mxu0 0
      %1508 = vmatmul.mubr.bf16.gmra.mrb[0].mxu0 %v1423
      %v1509 = vpop.f32.mrb[0].mxu0
      %v1510 = vadd.f32 0.0, %v1509
      %v1511 = vpop.f32.mrb[0].mxu0
      %v1512 = vadd.f32 0.0, %v1511
      %v1513 = vpop.f32.mrb[0].mxu0
      %v1514 = vadd.f32 0.0, %v1513
      %v1515 = vpop.f32.mrb[0].mxu0
      %v1516 = vadd.f32 0.0, %v1515
      %1517 = vmatprep.mubr.bf16.mxu0 0
      %1518 = vmatmul.mubr.bf16.gmra.mrb[0].mxu0 %v1424
      %v1519 = vpop.f32.mrb[0].mxu0
      %v1520 = vadd.f32 0.0, %v1519
      %v1521 = vpop.f32.mrb[0].mxu0
      %v1522 = vadd.f32 0.0, %v1521
      %v1523 = vpop.f32.mrb[0].mxu0
      %v1524 = vadd.f32 0.0, %v1523
      %v1525 = vpop.f32.mrb[0].mxu0
      %v1526 = vadd.f32 0.0, %v1525
      %1527 = vmatprep.mubr.bf16.mxu0 0
      %1528 = vmatmul.mubr.bf16.gmra.mrb[0].mxu0 %v1425
      %v1529 = vpop.f32.mrb[0].mxu0
      %v1530 = vadd.f32 0.0, %v1529
      %v1531 = vpop.f32.mrb[0].mxu0
      %v1532 = vadd.f32 0.0, %v1531
      %v1533 = vpop.f32.mrb[0].mxu0
      %v1534 = vadd.f32 0.0, %v1533
      %v1535 = vpop.f32.mrb[0].mxu0
      %v1536 = vadd.f32 0.0, %v1535
      %1537 = vmatprep.mubr.bf16.mxu0 0
      %1538 = vmatmul.mubr.bf16.gmra.mrb[0].mxu0 %v1426
      %v1539 = vpop.f32.mrb[0].mxu0
      %v1540 = vadd.f32 0.0, %v1539
      %v1541 = vpop.f32.mrb[0].mxu0
      %v1542 = vadd.f32 0.0, %v1541
      %v1543 = vpop.f32.mrb[0].mxu0
      %v1544 = vadd.f32 0.0, %v1543
      %v1545 = vpop.f32.mrb[0].mxu0
      %v1546 = vadd.f32 0.0, %v1545
      %1547 = vdwg.mxu0
      %v1548 = vmul.f32 %v1291, %v1153
      %v1549 = vmul.f32 %v1292, %v1155
      %v1550 = vmul.f32 %v1293, %v1157
      %v1551 = vmul.f32 %v1294, %v1159
      %v1552 = vmul.f32 %v1295, %v1163
      %v1553 = vmul.f32 %v1296, %v1165
      %v1554 = vmul.f32 %v1297, %v1167
      %v1555 = vmul.f32 %v1298, %v1169
      %v1556 = vmul.f32 %v1299, %v1173
      %v1557 = vmul.f32 %v1300, %v1175
      %v1558 = vmul.f32 %v1301, %v1177
      %v1559 = vmul.f32 %v1302, %v1179
      %v1560 = vmul.f32 %v1303, %v1183
      %v1561 = vmul.f32 %v1304, %v1185
      %v1562 = vmul.f32 %v1305, %v1187
      %v1563 = vmul.f32 %v1306, %v1189
      %v1564 = vmul.f32 %v1307, %v1193
      %v1565 = vmul.f32 %v1308, %v1195
      %v1566 = vmul.f32 %v1309, %v1197
      %v1567 = vmul.f32 %v1310, %v1199
      %v1568 = vmul.f32 %v1311, %v1203
      %v1569 = vmul.f32 %v1312, %v1205
      %v1570 = vmul.f32 %v1313, %v1207
      %v1571 = vmul.f32 %v1314, %v1209
      %v1572 = vmul.f32 %v1315, %v1133
      %v1573 = vmul.f32 %v1316, %v1135
      %v1574 = vmul.f32 %v1317, %v1137
      %v1575 = vmul.f32 %v1318, %v1139
      %v1576 = vmul.f32 %v1319, %v1143
      %v1577 = vmul.f32 %v1320, %v1145
      %v1578 = vmul.f32 %v1321, %v1147
      %v1579 = vmul.f32 %v1322, %v1149
      %v1580 = vpack.c.bf16 %v1550, %v1548
      %v1581 = vpack.c.bf16 %v1551, %v1549
      %v1582 = vpack.c.bf16 %v1554, %v1552
      %v1583 = vpack.c.bf16 %v1555, %v1553
      %v1584 = vpack.c.bf16 %v1558, %v1556
      %v1585 = vpack.c.bf16 %v1559, %v1557
      %v1586 = vpack.c.bf16 %v1562, %v1560
      %v1587 = vpack.c.bf16 %v1563, %v1561
      %v1588 = vpack.c.bf16 %v1566, %v1564
      %v1589 = vpack.c.bf16 %v1567, %v1565
      %v1590 = vpack.c.bf16 %v1570, %v1568
      %v1591 = vpack.c.bf16 %v1571, %v1569
      %v1592 = vpack.c.bf16 %v1574, %v1572
      %v1593 = vpack.c.bf16 %v1575, %v1573
      %v1594 = vpack.c.bf16 %v1578, %v1576
      %v1595 = vpack.c.bf16 %v1579, %v1577
      %1596 = vmatprep.subr.bf16.mxu0 %v1581
      %1597 = vmatpush1.bf16.msra.mxu0 %v1580
      %1598 = vmatprep.subr.bf16.mxu0 %v1583
      %1599 = vmatpush1.bf16.msra.mxu0 %v1582
      %1600 = vmatprep.subr.bf16.mxu0 %v1585
      %1601 = vmatpush1.bf16.msra.mxu0 %v1584
      %1602 = vmatprep.subr.bf16.mxu0 %v1587
      %1603 = vmatpush1.bf16.msra.mxu0 %v1586
      %1604 = vmatprep.subr.bf16.mxu0 %v1589
      %1605 = vmatpush1.bf16.msra.mxu0 %v1588
      %1606 = vmatprep.subr.bf16.mxu0 %v1591
      %1607 = vmatpush1.bf16.msra.mxu0 %v1590
      %1608 = vmatprep.subr.bf16.mxu0 %v1593
      %1609 = vmatpush1.bf16.msra.mxu0 %v1592
      %1610 = vmatprep.subr.bf16.mxu0 %v1595
      %1611 = vmatpush1.bf16.msra.mxu0 %v1594
      %1612 = vmatprep.subr.bf16.mxu0 0
      %1613 = vmatpush1.bf16.msra.mxu0 0
      %1614 = vmatprep.subr.bf16.mxu0 0
      %1615 = vmatpush1.bf16.msra.mxu0 0
      %1616 = vmatprep.subr.bf16.mxu0 0
      %1617 = vmatpush1.bf16.msra.mxu0 0
      %1618 = vmatprep.subr.bf16.mxu0 0
      %1619 = vmatpush1.bf16.msra.mxu0 0
      %1620 = vmatprep.subr.bf16.mxu0 0
      %1621 = vmatpush1.bf16.msra.mxu0 0
      %1622 = vmatprep.subr.bf16.mxu0 0
      %1623 = vmatpush1.bf16.msra.mxu0 0
      %1624 = vmatprep.subr.bf16.mxu0 0
      %1625 = vmatpush1.bf16.msra.mxu0 0
      %1626 = vmatprep.subr.bf16.mxu0 0
      %1627 = vmatpush1.bf16.msra.mxu0 0
      %1628 = vmatprep.mubr.bf16.mxu0 0
      %1629 = vmatmul.mubr.bf16.gmra.mrb[0].mxu0 %v1419
      %v1630 = vpop.f32.mrb[0].mxu0
      %v1631 = vadd.f32 0.0, %v1630
      %v1632 = vpop.f32.mrb[0].mxu0
      %v1633 = vadd.f32 0.0, %v1632
      %v1634 = vpop.f32.mrb[0].mxu0
      %v1635 = vadd.f32 0.0, %v1634
      %v1636 = vpop.f32.mrb[0].mxu0
      %v1637 = vadd.f32 0.0, %v1636
      %1638 = vmatprep.mubr.bf16.mxu0 0
      %1639 = vmatmul.mubr.bf16.gmra.mrb[0].mxu0 %v1420
      %v1640 = vpop.f32.mrb[0].mxu0
      %v1641 = vadd.f32 0.0, %v1640
      %v1642 = vpop.f32.mrb[0].mxu0
      %v1643 = vadd.f32 0.0, %v1642
      %v1644 = vpop.f32.mrb[0].mxu0
      %v1645 = vadd.f32 0.0, %v1644
      %v1646 = vpop.f32.mrb[0].mxu0
      %v1647 = vadd.f32 0.0, %v1646
      %1648 = vmatprep.mubr.bf16.mxu0 0
      %1649 = vmatmul.mubr.bf16.gmra.mrb[0].mxu0 %v1421
      %v1650 = vpop.f32.mrb[0].mxu0
      %v1651 = vadd.f32 0.0, %v1650
      %v1652 = vpop.f32.mrb[0].mxu0
      %v1653 = vadd.f32 0.0, %v1652
      %v1654 = vpop.f32.mrb[0].mxu0
      %v1655 = vadd.f32 0.0, %v1654
      %v1656 = vpop.f32.mrb[0].mxu0
      %v1657 = vadd.f32 0.0, %v1656
      %1658 = vmatprep.mubr.bf16.mxu0 0
      %1659 = vmatmul.mubr.bf16.gmra.mrb[0].mxu0 %v1422
      %v1660 = vpop.f32.mrb[0].mxu0
      %v1661 = vadd.f32 0.0, %v1660
      %v1662 = vpop.f32.mrb[0].mxu0
      %v1663 = vadd.f32 0.0, %v1662
      %v1664 = vpop.f32.mrb[0].mxu0
      %v1665 = vadd.f32 0.0, %v1664
      %v1666 = vpop.f32.mrb[0].mxu0
      %v1667 = vadd.f32 0.0, %v1666
      %1668 = vmatprep.mubr.bf16.mxu0 0
      %1669 = vmatmul.mubr.bf16.gmra.mrb[0].mxu0 %v1423
      %v1670 = vpop.f32.mrb[0].mxu0
      %v1671 = vadd.f32 0.0, %v1670
      %v1672 = vpop.f32.mrb[0].mxu0
      %v1673 = vadd.f32 0.0, %v1672
      %v1674 = vpop.f32.mrb[0].mxu0
      %v1675 = vadd.f32 0.0, %v1674
      %v1676 = vpop.f32.mrb[0].mxu0
      %v1677 = vadd.f32 0.0, %v1676
      %1678 = vmatprep.mubr.bf16.mxu0 0
      %1679 = vmatmul.mubr.bf16.gmra.mrb[0].mxu0 %v1424
      %v1680 = vpop.f32.mrb[0].mxu0
      %v1681 = vadd.f32 0.0, %v1680
      %v1682 = vpop.f32.mrb[0].mxu0
      %v1683 = vadd.f32 0.0, %v1682
      %v1684 = vpop.f32.mrb[0].mxu0
      %v1685 = vadd.f32 0.0, %v1684
      %v1686 = vpop.f32.mrb[0].mxu0
      %v1687 = vadd.f32 0.0, %v1686
      %1688 = vmatprep.mubr.bf16.mxu0 0
      %1689 = vmatmul.mubr.bf16.gmra.mrb[0].mxu0 %v1425
      %v1690 = vpop.f32.mrb[0].mxu0
      %v1691 = vadd.f32 0.0, %v1690
      %v1692 = vpop.f32.mrb[0].mxu0
      %v1693 = vadd.f32 0.0, %v1692
      %v1694 = vpop.f32.mrb[0].mxu0
      %v1695 = vadd.f32 0.0, %v1694
      %v1696 = vpop.f32.mrb[0].mxu0
      %v1697 = vadd.f32 0.0, %v1696
      %1698 = vmatprep.mubr.bf16.mxu0 0
      %1699 = vmatmul.mubr.bf16.gmra.mrb[0].mxu0 %v1426
      %v1700 = vpop.f32.mrb[0].mxu0
      %v1701 = vadd.f32 0.0, %v1700
      %v1702 = vpop.f32.mrb[0].mxu0
      %v1703 = vadd.f32 0.0, %v1702
      %v1704 = vpop.f32.mrb[0].mxu0
      %v1705 = vadd.f32 0.0, %v1704
      %v1706 = vpop.f32.mrb[0].mxu0
      %v1707 = vadd.f32 0.0, %v1706
      %1708 = vdwg.mxu0
      %v1709 = vmul.f32 %v1291, %v1173
      %v1710 = vmul.f32 %v1292, %v1175
      %v1711 = vmul.f32 %v1293, %v1177
      %v1712 = vmul.f32 %v1294, %v1179
      %v1713 = vmul.f32 %v1295, %v1183
      %v1714 = vmul.f32 %v1296, %v1185
      %v1715 = vmul.f32 %v1297, %v1187
      %v1716 = vmul.f32 %v1298, %v1189
      %v1717 = vmul.f32 %v1299, %v1193
      %v1718 = vmul.f32 %v1300, %v1195
      %v1719 = vmul.f32 %v1301, %v1197
      %v1720 = vmul.f32 %v1302, %v1199
      %v1721 = vmul.f32 %v1303, %v1203
      %v1722 = vmul.f32 %v1304, %v1205
      %v1723 = vmul.f32 %v1305, %v1207
      %v1724 = vmul.f32 %v1306, %v1209
      %v1725 = vmul.f32 %v1307, %v1133
      %v1726 = vmul.f32 %v1308, %v1135
      %v1727 = vmul.f32 %v1309, %v1137
      %v1728 = vmul.f32 %v1310, %v1139
      %v1729 = vmul.f32 %v1311, %v1143
      %v1730 = vmul.f32 %v1312, %v1145
      %v1731 = vmul.f32 %v1313, %v1147
      %v1732 = vmul.f32 %v1314, %v1149
      %v1733 = vmul.f32 %v1315, %v1153
      %v1734 = vmul.f32 %v1316, %v1155
      %v1735 = vmul.f32 %v1317, %v1157
      %v1736 = vmul.f32 %v1318, %v1159
      %v1737 = vmul.f32 %v1319, %v1163
      %v1738 = vmul.f32 %v1320, %v1165
      %v1739 = vmul.f32 %v1321, %v1167
      %v1740 = vmul.f32 %v1322, %v1169
      %v1741 = vpack.c.bf16 %v1711, %v1709
      %v1742 = vpack.c.bf16 %v1712, %v1710
      %v1743 = vpack.c.bf16 %v1715, %v1713
      %v1744 = vpack.c.bf16 %v1716, %v1714
      %v1745 = vpack.c.bf16 %v1719, %v1717
      %v1746 = vpack.c.bf16 %v1720, %v1718
      %v1747 = vpack.c.bf16 %v1723, %v1721
      %v1748 = vpack.c.bf16 %v1724, %v1722
      %v1749 = vpack.c.bf16 %v1727, %v1725
      %v1750 = vpack.c.bf16 %v1728, %v1726
      %v1751 = vpack.c.bf16 %v1731, %v1729
      %v1752 = vpack.c.bf16 %v1732, %v1730
      %v1753 = vpack.c.bf16 %v1735, %v1733
      %v1754 = vpack.c.bf16 %v1736, %v1734
      %v1755 = vpack.c.bf16 %v1739, %v1737
      %v1756 = vpack.c.bf16 %v1740, %v1738
      %1757 = vmatprep.subr.bf16.mxu0 %v1742
      %1758 = vmatpush1.bf16.msra.mxu0 %v1741
      %1759 = vmatprep.subr.bf16.mxu0 %v1744
      %1760 = vmatpush1.bf16.msra.mxu0 %v1743
      %1761 = vmatprep.subr.bf16.mxu0 %v1746
      %1762 = vmatpush1.bf16.msra.mxu0 %v1745
      %1763 = vmatprep.subr.bf16.mxu0 %v1748
      %1764 = vmatpush1.bf16.msra.mxu0 %v1747
      %1765 = vmatprep.subr.bf16.mxu0 %v1750
      %1766 = vmatpush1.bf16.msra.mxu0 %v1749
      %1767 = vmatprep.subr.bf16.mxu0 %v1752
      %1768 = vmatpush1.bf16.msra.mxu0 %v1751
      %1769 = vmatprep.subr.bf16.mxu0 %v1754
      %1770 = vmatpush1.bf16.msra.mxu0 %v1753
      %1771 = vmatprep.subr.bf16.mxu0 %v1756
      %1772 = vmatpush1.bf16.msra.mxu0 %v1755
      %1773 = vmatprep.subr.bf16.mxu0 0
      %1774 = vmatpush1.bf16.msra.mxu0 0
      %1775 = vmatprep.subr.bf16.mxu0 0
      %1776 = vmatpush1.bf16.msra.mxu0 0
      %1777 = vmatprep.subr.bf16.mxu0 0
      %1778 = vmatpush1.bf16.msra.mxu0 0
      %1779 = vmatprep.subr.bf16.mxu0 0
      %1780 = vmatpush1.bf16.msra.mxu0 0
      %1781 = vmatprep.subr.bf16.mxu0 0
      %1782 = vmatpush1.bf16.msra.mxu0 0
      %1783 = vmatprep.subr.bf16.mxu0 0
      %1784 = vmatpush1.bf16.msra.mxu0 0
      %1785 = vmatprep.subr.bf16.mxu0 0
      %1786 = vmatpush1.bf16.msra.mxu0 0
      %1787 = vmatprep.subr.bf16.mxu0 0
      %1788 = vmatpush1.bf16.msra.mxu0 0
      %1789 = vmatprep.mubr.bf16.mxu0 0
      %1790 = vmatmul.mubr.bf16.gmra.mrb[0].mxu0 %v1419
      %v1791 = vpop.f32.mrb[0].mxu0
      %v1792 = vadd.f32 0.0, %v1791
      %v1793 = vpop.f32.mrb[0].mxu0
      %v1794 = vadd.f32 0.0, %v1793
      %v1795 = vpop.f32.mrb[0].mxu0
      %v1796 = vadd.f32 0.0, %v1795
      %v1797 = vpop.f32.mrb[0].mxu0
      %v1798 = vadd.f32 0.0, %v1797
      %1799 = vmatprep.mubr.bf16.mxu0 0
      %1800 = vmatmul.mubr.bf16.gmra.mrb[0].mxu0 %v1420
      %v1801 = vpop.f32.mrb[0].mxu0
      %v1802 = vadd.f32 0.0, %v1801
      %v1803 = vpop.f32.mrb[0].mxu0
      %v1804 = vadd.f32 0.0, %v1803
      %v1805 = vpop.f32.mrb[0].mxu0
      %v1806 = vadd.f32 0.0, %v1805
      %v1807 = vpop.f32.mrb[0].mxu0
      %v1808 = vadd.f32 0.0, %v1807
      %1809 = vmatprep.mubr.bf16.mxu0 0
      %1810 = vmatmul.mubr.bf16.gmra.mrb[0].mxu0 %v1421
      %v1811 = vpop.f32.mrb[0].mxu0
      %v1812 = vadd.f32 0.0, %v1811
      %v1813 = vpop.f32.mrb[0].mxu0
      %v1814 = vadd.f32 0.0, %v1813
      %v1815 = vpop.f32.mrb[0].mxu0
      %v1816 = vadd.f32 0.0, %v1815
      %v1817 = vpop.f32.mrb[0].mxu0
      %v1818 = vadd.f32 0.0, %v1817
      %1819 = vmatprep.mubr.bf16.mxu0 0
      %1820 = vmatmul.mubr.bf16.gmra.mrb[0].mxu0 %v1422
      %v1821 = vpop.f32.mrb[0].mxu0
      %v1822 = vadd.f32 0.0, %v1821
      %v1823 = vpop.f32.mrb[0].mxu0
      %v1824 = vadd.f32 0.0, %v1823
      %v1825 = vpop.f32.mrb[0].mxu0
      %v1826 = vadd.f32 0.0, %v1825
      %v1827 = vpop.f32.mrb[0].mxu0
      %v1828 = vadd.f32 0.0, %v1827
      %1829 = vmatprep.mubr.bf16.mxu0 0
      %1830 = vmatmul.mubr.bf16.gmra.mrb[0].mxu0 %v1423
      %v1831 = vpop.f32.mrb[0].mxu0
      %v1832 = vadd.f32 0.0, %v1831
      %v1833 = vpop.f32.mrb[0].mxu0
      %v1834 = vadd.f32 0.0, %v1833
      %v1835 = vpop.f32.mrb[0].mxu0
      %v1836 = vadd.f32 0.0, %v1835
      %v1837 = vpop.f32.mrb[0].mxu0
      %v1838 = vadd.f32 0.0, %v1837
      %1839 = vmatprep.mubr.bf16.mxu0 0
      %1840 = vmatmul.mubr.bf16.gmra.mrb[0].mxu0 %v1424
      %v1841 = vpop.f32.mrb[0].mxu0
      %v1842 = vadd.f32 0.0, %v1841
      %v1843 = vpop.f32.mrb[0].mxu0
      %v1844 = vadd.f32 0.0, %v1843
      %v1845 = vpop.f32.mrb[0].mxu0
      %v1846 = vadd.f32 0.0, %v1845
      %v1847 = vpop.f32.mrb[0].mxu0
      %v1848 = vadd.f32 0.0, %v1847
      %1849 = vmatprep.mubr.bf16.mxu0 0
      %1850 = vmatmul.mubr.bf16.gmra.mrb[0].mxu0 %v1425
      %v1851 = vpop.f32.mrb[0].mxu0
      %v1852 = vadd.f32 0.0, %v1851
      %v1853 = vpop.f32.mrb[0].mxu0
      %v1854 = vadd.f32 0.0, %v1853
      %v1855 = vpop.f32.mrb[0].mxu0
      %v1856 = vadd.f32 0.0, %v1855
      %v1857 = vpop.f32.mrb[0].mxu0
      %v1858 = vadd.f32 0.0, %v1857
      %1859 = vmatprep.mubr.bf16.mxu0 0
      %1860 = vmatmul.mubr.bf16.gmra.mrb[0].mxu0 %v1426
      %v1861 = vpop.f32.mrb[0].mxu0
      %v1862 = vadd.f32 0.0, %v1861
      %v1863 = vpop.f32.mrb[0].mxu0
      %v1864 = vadd.f32 0.0, %v1863
      %v1865 = vpop.f32.mrb[0].mxu0
      %v1866 = vadd.f32 0.0, %v1865
      %v1867 = vpop.f32.mrb[0].mxu0
      %v1868 = vadd.f32 0.0, %v1867
      %1869 = vdwg.mxu0
      %v1870 = vmul.f32 %v1291, %v1193
      %v1871 = vmul.f32 %v1292, %v1195
      %v1872 = vmul.f32 %v1293, %v1197
      %v1873 = vmul.f32 %v1294, %v1199
      %v1874 = vmul.f32 %v1295, %v1203
      %v1875 = vmul.f32 %v1296, %v1205
      %v1876 = vmul.f32 %v1297, %v1207
      %v1877 = vmul.f32 %v1298, %v1209
      %v1878 = vmul.f32 %v1299, %v1133
      %v1879 = vmul.f32 %v1300, %v1135
      %v1880 = vmul.f32 %v1301, %v1137
      %v1881 = vmul.f32 %v1302, %v1139
      %v1882 = vmul.f32 %v1303, %v1143
      %v1883 = vmul.f32 %v1304, %v1145
      %v1884 = vmul.f32 %v1305, %v1147
      %v1885 = vmul.f32 %v1306, %v1149
      %v1886 = vmul.f32 %v1307, %v1153
      %v1887 = vmul.f32 %v1308, %v1155
      %v1888 = vmul.f32 %v1309, %v1157
      %v1889 = vmul.f32 %v1310, %v1159
      %v1890 = vmul.f32 %v1311, %v1163
      %v1891 = vmul.f32 %v1312, %v1165
      %v1892 = vmul.f32 %v1313, %v1167
      %v1893 = vmul.f32 %v1314, %v1169
      %v1894 = vmul.f32 %v1315, %v1173
      %v1895 = vmul.f32 %v1316, %v1175
      %v1896 = vmul.f32 %v1317, %v1177
      %v1897 = vmul.f32 %v1318, %v1179
      %v1898 = vmul.f32 %v1319, %v1183
      %v1899 = vmul.f32 %v1320, %v1185
      %v1900 = vmul.f32 %v1321, %v1187
      %v1901 = vmul.f32 %v1322, %v1189
      %v1902 = vpack.c.bf16 %v1872, %v1870
      %v1903 = vpack.c.bf16 %v1873, %v1871
      %v1904 = vpack.c.bf16 %v1876, %v1874
      %v1905 = vpack.c.bf16 %v1877, %v1875
      %v1906 = vpack.c.bf16 %v1880, %v1878
      %v1907 = vpack.c.bf16 %v1881, %v1879
      %v1908 = vpack.c.bf16 %v1884, %v1882
      %v1909 = vpack.c.bf16 %v1885, %v1883
      %v1910 = vpack.c.bf16 %v1888, %v1886
      %v1911 = vpack.c.bf16 %v1889, %v1887
      %v1912 = vpack.c.bf16 %v1892, %v1890
      %v1913 = vpack.c.bf16 %v1893, %v1891
      %v1914 = vpack.c.bf16 %v1896, %v1894
      %v1915 = vpack.c.bf16 %v1897, %v1895
      %v1916 = vpack.c.bf16 %v1900, %v1898
      %v1917 = vpack.c.bf16 %v1901, %v1899
      %1918 = vmatprep.subr.bf16.mxu0 %v1903
      %1919 = vmatpush1.bf16.msra.mxu0 %v1902
      %1920 = vmatprep.subr.bf16.mxu0 %v1905
      %1921 = vmatpush1.bf16.msra.mxu0 %v1904
      %1922 = vmatprep.subr.bf16.mxu0 %v1907
      %1923 = vmatpush1.bf16.msra.mxu0 %v1906
      %1924 = vmatprep.subr.bf16.mxu0 %v1909
      %1925 = vmatpush1.bf16.msra.mxu0 %v1908
      %1926 = vmatprep.subr.bf16.mxu0 %v1911
      %1927 = vmatpush1.bf16.msra.mxu0 %v1910
      %1928 = vmatprep.subr.bf16.mxu0 %v1913
      %1929 = vmatpush1.bf16.msra.mxu0 %v1912
      %1930 = vmatprep.subr.bf16.mxu0 %v1915
      %1931 = vmatpush1.bf16.msra.mxu0 %v1914
      %1932 = vmatprep.subr.bf16.mxu0 %v1917
      %1933 = vmatpush1.bf16.msra.mxu0 %v1916
      %1934 = vmatprep.subr.bf16.mxu0 0
      %1935 = vmatpush1.bf16.msra.mxu0 0
      %1936 = vmatprep.subr.bf16.mxu0 0
      %1937 = vmatpush1.bf16.msra.mxu0 0
      %1938 = vmatprep.subr.bf16.mxu0 0
      %1939 = vmatpush1.bf16.msra.mxu0 0
      %1940 = vmatprep.subr.bf16.mxu0 0
      %1941 = vmatpush1.bf16.msra.mxu0 0
      %1942 = vmatprep.subr.bf16.mxu0 0
      %1943 = vmatpush1.bf16.msra.mxu0 0
      %1944 = vmatprep.subr.bf16.mxu0 0
      %1945 = vmatpush1.bf16.msra.mxu0 0
      %1946 = vmatprep.subr.bf16.mxu0 0
      %1947 = vmatpush1.bf16.msra.mxu0 0
      %1948 = vmatprep.subr.bf16.mxu0 0
      %1949 = vmatpush1.bf16.msra.mxu0 0
      %1950 = vmatprep.mubr.bf16.mxu0 0
      %1951 = vmatmul.mubr.bf16.gmra.mrb[0].mxu0 %v1419
      %v1952 = vpop.f32.mrb[0].mxu0
      %v1953 = vadd.f32 0.0, %v1952
      %v1954 = vpop.f32.mrb[0].mxu0
      %v1955 = vadd.f32 0.0, %v1954
      %v1956 = vpop.f32.mrb[0].mxu0
      %v1957 = vadd.f32 0.0, %v1956
      %v1958 = vpop.f32.mrb[0].mxu0
      %v1959 = vadd.f32 0.0, %v1958
      %1960 = vmatprep.mubr.bf16.mxu0 0
      %1961 = vmatmul.mubr.bf16.gmra.mrb[0].mxu0 %v1420
      %v1962 = vpop.f32.mrb[0].mxu0
      %v1963 = vadd.f32 0.0, %v1962
      %v1964 = vpop.f32.mrb[0].mxu0
      %v1965 = vadd.f32 0.0, %v1964
      %v1966 = vpop.f32.mrb[0].mxu0
      %v1967 = vadd.f32 0.0, %v1966
      %v1968 = vpop.f32.mrb[0].mxu0
      %v1969 = vadd.f32 0.0, %v1968
      %1970 = vmatprep.mubr.bf16.mxu0 0
      %1971 = vmatmul.mubr.bf16.gmra.mrb[0].mxu0 %v1421
      %v1972 = vpop.f32.mrb[0].mxu0
      %v1973 = vadd.f32 0.0, %v1972
      %v1974 = vpop.f32.mrb[0].mxu0
      %v1975 = vadd.f32 0.0, %v1974
      %v1976 = vpop.f32.mrb[0].mxu0
      %v1977 = vadd.f32 0.0, %v1976
      %v1978 = vpop.f32.mrb[0].mxu0
      %v1979 = vadd.f32 0.0, %v1978
      %1980 = vmatprep.mubr.bf16.mxu0 0
      %1981 = vmatmul.mubr.bf16.gmra.mrb[0].mxu0 %v1422
      %v1982 = vpop.f32.mrb[0].mxu0
      %v1983 = vadd.f32 0.0, %v1982
      %v1984 = vpop.f32.mrb[0].mxu0
      %v1985 = vadd.f32 0.0, %v1984
      %v1986 = vpop.f32.mrb[0].mxu0
      %v1987 = vadd.f32 0.0, %v1986
      %v1988 = vpop.f32.mrb[0].mxu0
      %v1989 = vadd.f32 0.0, %v1988
      %1990 = vmatprep.mubr.bf16.mxu0 0
      %1991 = vmatmul.mubr.bf16.gmra.mrb[0].mxu0 %v1423
      %v1992 = vpop.f32.mrb[0].mxu0
      %v1993 = vadd.f32 0.0, %v1992
      %v1994 = vpop.f32.mrb[0].mxu0
      %v1995 = vadd.f32 0.0, %v1994
      %v1996 = vpop.f32.mrb[0].mxu0
      %v1997 = vadd.f32 0.0, %v1996
      %v1998 = vpop.f32.mrb[0].mxu0
      %v1999 = vadd.f32 0.0, %v1998
      %2000 = vmatprep.mubr.bf16.mxu0 0
      %2001 = vmatmul.mubr.bf16.gmra.mrb[0].mxu0 %v1424
      %v2002 = vpop.f32.mrb[0].mxu0
      %v2003 = vadd.f32 0.0, %v2002
      %v2004 = vpop.f32.mrb[0].mxu0
      %v2005 = vadd.f32 0.0, %v2004
      %v2006 = vpop.f32.mrb[0].mxu0
      %v2007 = vadd.f32 0.0, %v2006
      %v2008 = vpop.f32.mrb[0].mxu0
      %v2009 = vadd.f32 0.0, %v2008
      %2010 = vmatprep.mubr.bf16.mxu0 0
      %2011 = vmatmul.mubr.bf16.gmra.mrb[0].mxu0 %v1425
      %v2012 = vpop.f32.mrb[0].mxu0
      %v2013 = vadd.f32 0.0, %v2012
      %v2014 = vpop.f32.mrb[0].mxu0
      %v2015 = vadd.f32 0.0, %v2014
      %v2016 = vpop.f32.mrb[0].mxu0
      %v2017 = vadd.f32 0.0, %v2016
      %v2018 = vpop.f32.mrb[0].mxu0
      %v2019 = vadd.f32 0.0, %v2018
      %2020 = vmatprep.mubr.bf16.mxu0 0
      %2021 = vmatmul.mubr.bf16.gmra.mrb[0].mxu0 %v1426
      %v2022 = vpop.f32.mrb[0].mxu0
      %v2023 = vadd.f32 0.0, %v2022
      %v2024 = vpop.f32.mrb[0].mxu0
      %v2025 = vadd.f32 0.0, %v2024
      %v2026 = vpop.f32.mrb[0].mxu0
      %v2027 = vadd.f32 0.0, %v2026
      %v2028 = vpop.f32.mrb[0].mxu0
      %v2029 = vadd.f32 0.0, %v2028
      %2030 = vdwg.mxu0
      %v2031 = vmax.f32 %v1470, %v1631
      %v2032 = vmax.f32 %v1472, %v1633
      %v2033 = vmax.f32 %v1474, %v1635
      %v2034 = vmax.f32 %v1476, %v1637
      %v2035 = vmax.f32 %v1480, %v1641
      %v2036 = vmax.f32 %v1482, %v1643
      %v2037 = vmax.f32 %v1484, %v1645
      %v2038 = vmax.f32 %v1486, %v1647
      %v2039 = vmax.f32 %v1490, %v1651
      %v2040 = vmax.f32 %v1492, %v1653
      %v2041 = vmax.f32 %v1494, %v1655
      %v2042 = vmax.f32 %v1496, %v1657
      %v2043 = vmax.f32 %v1500, %v1661
      %v2044 = vmax.f32 %v1502, %v1663
      %v2045 = vmax.f32 %v1504, %v1665
      %v2046 = vmax.f32 %v1506, %v1667
      %v2047 = vmax.f32 %v1510, %v1671
      %v2048 = vmax.f32 %v1512, %v1673
      %v2049 = vmax.f32 %v1514, %v1675
      %v2050 = vmax.f32 %v1516, %v1677
      %v2051 = vmax.f32 %v1520, %v1681
      %v2052 = vmax.f32 %v1522, %v1683
      %v2053 = vmax.f32 %v1524, %v1685
      %v2054 = vmax.f32 %v1526, %v1687
      %v2055 = vmax.f32 %v1530, %v1691
      %v2056 = vmax.f32 %v1532, %v1693
      %v2057 = vmax.f32 %v1534, %v1695
      %v2058 = vmax.f32 %v1536, %v1697
      %v2059 = vmax.f32 %v1540, %v1701
      %v2060 = vmax.f32 %v1542, %v1703
      %v2061 = vmax.f32 %v1544, %v1705
      %v2062 = vmax.f32 %v1546, %v1707
      %v2063 = vmax.f32 %v2031, %v1792
      %v2064 = vmax.f32 %v2032, %v1794
      %v2065 = vmax.f32 %v2033, %v1796
      %v2066 = vmax.f32 %v2034, %v1798
      %v2067 = vmax.f32 %v2035, %v1802
      %v2068 = vmax.f32 %v2036, %v1804
      %v2069 = vmax.f32 %v2037, %v1806
      %v2070 = vmax.f32 %v2038, %v1808
      %v2071 = vmax.f32 %v2039, %v1812
      %v2072 = vmax.f32 %v2040, %v1814
      %v2073 = vmax.f32 %v2041, %v1816
      %v2074 = vmax.f32 %v2042, %v1818
      %v2075 = vmax.f32 %v2043, %v1822
      %v2076 = vmax.f32 %v2044, %v1824
      %v2077 = vmax.f32 %v2045, %v1826
      %v2078 = vmax.f32 %v2046, %v1828
      %v2079 = vmax.f32 %v2047, %v1832
      %v2080 = vmax.f32 %v2048, %v1834
      %v2081 = vmax.f32 %v2049, %v1836
      %v2082 = vmax.f32 %v2050, %v1838
      %v2083 = vmax.f32 %v2051, %v1842
      %v2084 = vmax.f32 %v2052, %v1844
      %v2085 = vmax.f32 %v2053, %v1846
      %v2086 = vmax.f32 %v2054, %v1848
      %v2087 = vmax.f32 %v2055, %v1852
      %v2088 = vmax.f32 %v2056, %v1854
      %v2089 = vmax.f32 %v2057, %v1856
      %v2090 = vmax.f32 %v2058, %v1858
      %v2091 = vmax.f32 %v2059, %v1862
      %v2092 = vmax.f32 %v2060, %v1864
      %v2093 = vmax.f32 %v2061, %v1866
      %v2094 = vmax.f32 %v2062, %v1868
      %v2095 = vmax.f32 %v2063, %v1953
      %v2096 = vmax.f32 %v2064, %v1955
      %v2097 = vmax.f32 %v2065, %v1957
      %v2098 = vmax.f32 %v2066, %v1959
      %v2099 = vmax.f32 %v2067, %v1963
      %v2100 = vmax.f32 %v2068, %v1965
      %v2101 = vmax.f32 %v2069, %v1967
      %v2102 = vmax.f32 %v2070, %v1969
      %v2103 = vmax.f32 %v2071, %v1973
      %v2104 = vmax.f32 %v2072, %v1975
      %v2105 = vmax.f32 %v2073, %v1977
      %v2106 = vmax.f32 %v2074, %v1979
      %v2107 = vmax.f32 %v2075, %v1983
      %v2108 = vmax.f32 %v2076, %v1985
      %v2109 = vmax.f32 %v2077, %v1987
      %v2110 = vmax.f32 %v2078, %v1989
      %v2111 = vmax.f32 %v2079, %v1993
      %v2112 = vmax.f32 %v2080, %v1995
      %v2113 = vmax.f32 %v2081, %v1997
      %v2114 = vmax.f32 %v2082, %v1999
      %v2115 = vmax.f32 %v2083, %v2003
      %v2116 = vmax.f32 %v2084, %v2005
      %v2117 = vmax.f32 %v2085, %v2007
      %v2118 = vmax.f32 %v2086, %v2009
      %v2119 = vmax.f32 %v2087, %v2013
      %v2120 = vmax.f32 %v2088, %v2015
      %v2121 = vmax.f32 %v2089, %v2017
      %v2122 = vmax.f32 %v2090, %v2019
      %v2123 = vmax.f32 %v2091, %v2023
      %v2124 = vmax.f32 %v2092, %v2025
      %v2125 = vmax.f32 %v2093, %v2027
      %v2126 = vmax.f32 %v2094, %v2029
      %v2127 = vsub.f32 %v1470, %v2095
      %v2128 = vsub.f32 %v1472, %v2096
      %v2129 = vsub.f32 %v1474, %v2097
      %v2130 = vsub.f32 %v1476, %v2098
      %v2131 = vsub.f32 %v1480, %v2099
      %v2132 = vsub.f32 %v1482, %v2100
      %v2133 = vsub.f32 %v1484, %v2101
      %v2134 = vsub.f32 %v1486, %v2102
      %v2135 = vsub.f32 %v1490, %v2103
      %v2136 = vsub.f32 %v1492, %v2104
      %v2137 = vsub.f32 %v1494, %v2105
      %v2138 = vsub.f32 %v1496, %v2106
      %v2139 = vsub.f32 %v1500, %v2107
      %v2140 = vsub.f32 %v1502, %v2108
      %v2141 = vsub.f32 %v1504, %v2109
      %v2142 = vsub.f32 %v1506, %v2110
      %v2143 = vsub.f32 %v1510, %v2111
      %v2144 = vsub.f32 %v1512, %v2112
      %v2145 = vsub.f32 %v1514, %v2113
      %v2146 = vsub.f32 %v1516, %v2114
      %v2147 = vsub.f32 %v1520, %v2115
      %v2148 = vsub.f32 %v1522, %v2116
      %v2149 = vsub.f32 %v1524, %v2117
      %v2150 = vsub.f32 %v1526, %v2118
      %v2151 = vsub.f32 %v1530, %v2119
      %v2152 = vsub.f32 %v1532, %v2120
      %v2153 = vsub.f32 %v1534, %v2121
      %v2154 = vsub.f32 %v1536, %v2122
      %v2155 = vsub.f32 %v1540, %v2123
      %v2156 = vsub.f32 %v1542, %v2124
      %v2157 = vsub.f32 %v1544, %v2125
      %v2158 = vsub.f32 %v1546, %v2126
      %v2159 = vmul.f32 %v2127, 1.442695
      %v2160 = vpow.pop %v2159
      %v2161 = vmul.f32 %v2128, 1.442695
      %v2162 = vpow.pop %v2161
      %v2163 = vmul.f32 %v2129, 1.442695
      %v2164 = vpow.pop %v2163
      %v2165 = vmul.f32 %v2130, 1.442695
      %v2166 = vpow.pop %v2165
      %v2167 = vmul.f32 %v2131, 1.442695
      %v2168 = vpow.pop %v2167
      %v2169 = vmul.f32 %v2132, 1.442695
      %v2170 = vpow.pop %v2169
      %v2171 = vmul.f32 %v2133, 1.442695
      %v2172 = vpow.pop %v2171
      %v2173 = vmul.f32 %v2134, 1.442695
      %v2174 = vpow.pop %v2173
      %v2175 = vmul.f32 %v2135, 1.442695
      %v2176 = vpow.pop %v2175
      %v2177 = vmul.f32 %v2136, 1.442695
      %v2178 = vpow.pop %v2177
      %v2179 = vmul.f32 %v2137, 1.442695
      %v2180 = vpow.pop %v2179
      %v2181 = vmul.f32 %v2138, 1.442695
      %v2182 = vpow.pop %v2181
      %v2183 = vmul.f32 %v2139, 1.442695
      %v2184 = vpow.pop %v2183
      %v2185 = vmul.f32 %v2140, 1.442695
      %v2186 = vpow.pop %v2185
      %v2187 = vmul.f32 %v2141, 1.442695
      %v2188 = vpow.pop %v2187
      %v2189 = vmul.f32 %v2142, 1.442695
      %v2190 = vpow.pop %v2189
      %v2191 = vmul.f32 %v2143, 1.442695
      %v2192 = vpow.pop %v2191
      %v2193 = vmul.f32 %v2144, 1.442695
      %v2194 = vpow.pop %v2193
      %v2195 = vmul.f32 %v2145, 1.442695
      %v2196 = vpow.pop %v2195
      %v2197 = vmul.f32 %v2146, 1.442695
      %v2198 = vpow.pop %v2197
      %v2199 = vmul.f32 %v2147, 1.442695
      %v2200 = vpow.pop %v2199
      %v2201 = vmul.f32 %v2148, 1.442695
      %v2202 = vpow.pop %v2201
      %v2203 = vmul.f32 %v2149, 1.442695
      %v2204 = vpow.pop %v2203
      %v2205 = vmul.f32 %v2150, 1.442695
      %v2206 = vpow.pop %v2205
      %v2207 = vmul.f32 %v2151, 1.442695
      %v2208 = vpow.pop %v2207
      %v2209 = vmul.f32 %v2152, 1.442695
      %v2210 = vpow.pop %v2209
      %v2211 = vmul.f32 %v2153, 1.442695
      %v2212 = vpow.pop %v2211
      %v2213 = vmul.f32 %v2154, 1.442695
      %v2214 = vpow.pop %v2213
      %v2215 = vmul.f32 %v2155, 1.442695
      %v2216 = vpow.pop %v2215
      %v2217 = vmul.f32 %v2156, 1.442695
      %v2218 = vpow.pop %v2217
      %v2219 = vmul.f32 %v2157, 1.442695
      %v2220 = vpow.pop %v2219
      %v2221 = vmul.f32 %v2158, 1.442695
      %v2222 = vpow.pop %v2221
      %v2223 = vsub.f32 %v1631, %v2095
      %v2224 = vsub.f32 %v1633, %v2096
      %v2225 = vsub.f32 %v1635, %v2097
      %v2226 = vsub.f32 %v1637, %v2098
      %v2227 = vsub.f32 %v1641, %v2099
      %v2228 = vsub.f32 %v1643, %v2100
      %v2229 = vsub.f32 %v1645, %v2101
      %v2230 = vsub.f32 %v1647, %v2102
      %v2231 = vsub.f32 %v1651, %v2103
      %v2232 = vsub.f32 %v1653, %v2104
      %v2233 = vsub.f32 %v1655, %v2105
      %v2234 = vsub.f32 %v1657, %v2106
      %v2235 = vsub.f32 %v1661, %v2107
      %v2236 = vsub.f32 %v1663, %v2108
      %v2237 = vsub.f32 %v1665, %v2109
      %v2238 = vsub.f32 %v1667, %v2110
      %v2239 = vsub.f32 %v1671, %v2111
      %v2240 = vsub.f32 %v1673, %v2112
      %v2241 = vsub.f32 %v1675, %v2113
      %v2242 = vsub.f32 %v1677, %v2114
      %v2243 = vsub.f32 %v1681, %v2115
      %v2244 = vsub.f32 %v1683, %v2116
      %v2245 = vsub.f32 %v1685, %v2117
      %v2246 = vsub.f32 %v1687, %v2118
      %v2247 = vsub.f32 %v1691, %v2119
      %v2248 = vsub.f32 %v1693, %v2120
      %v2249 = vsub.f32 %v1695, %v2121
      %v2250 = vsub.f32 %v1697, %v2122
      %v2251 = vsub.f32 %v1701, %v2123
      %v2252 = vsub.f32 %v1703, %v2124
      %v2253 = vsub.f32 %v1705, %v2125
      %v2254 = vsub.f32 %v1707, %v2126
      %v2255 = vmul.f32 %v2223, 1.442695
      %v2256 = vpow.pop %v2255
      %v2257 = vmul.f32 %v2224, 1.442695
      %v2258 = vpow.pop %v2257
      %v2259 = vmul.f32 %v2225, 1.442695
      %v2260 = vpow.pop %v2259
      %v2261 = vmul.f32 %v2226, 1.442695
      %v2262 = vpow.pop %v2261
      %v2263 = vmul.f32 %v2227, 1.442695
      %v2264 = vpow.pop %v2263
      %v2265 = vmul.f32 %v2228, 1.442695
      %v2266 = vpow.pop %v2265
      %v2267 = vmul.f32 %v2229, 1.442695
      %v2268 = vpow.pop %v2267
      %v2269 = vmul.f32 %v2230, 1.442695
      %v2270 = vpow.pop %v2269
      %v2271 = vmul.f32 %v2231, 1.442695
      %v2272 = vpow.pop %v2271
      %v2273 = vmul.f32 %v2232, 1.442695
      %v2274 = vpow.pop %v2273
      %v2275 = vmul.f32 %v2233, 1.442695
      %v2276 = vpow.pop %v2275
      %v2277 = vmul.f32 %v2234, 1.442695
      %v2278 = vpow.pop %v2277
      %v2279 = vmul.f32 %v2235, 1.442695
      %v2280 = vpow.pop %v2279
      %v2281 = vmul.f32 %v2236, 1.442695
      %v2282 = vpow.pop %v2281
      %v2283 = vmul.f32 %v2237, 1.442695
      %v2284 = vpow.pop %v2283
      %v2285 = vmul.f32 %v2238, 1.442695
      %v2286 = vpow.pop %v2285
      %v2287 = vmul.f32 %v2239, 1.442695
      %v2288 = vpow.pop %v2287
      %v2289 = vmul.f32 %v2240, 1.442695
      %v2290 = vpow.pop %v2289
      %v2291 = vmul.f32 %v2241, 1.442695
      %v2292 = vpow.pop %v2291
      %v2293 = vmul.f32 %v2242, 1.442695
      %v2294 = vpow.pop %v2293
      %v2295 = vmul.f32 %v2243, 1.442695
      %v2296 = vpow.pop %v2295
      %v2297 = vmul.f32 %v2244, 1.442695
      %v2298 = vpow.pop %v2297
      %v2299 = vmul.f32 %v2245, 1.442695
      %v2300 = vpow.pop %v2299
      %v2301 = vmul.f32 %v2246, 1.442695
      %v2302 = vpow.pop %v2301
      %v2303 = vmul.f32 %v2247, 1.442695
      %v2304 = vpow.pop %v2303
      %v2305 = vmul.f32 %v2248, 1.442695
      %v2306 = vpow.pop %v2305
      %v2307 = vmul.f32 %v2249, 1.442695
      %v2308 = vpow.pop %v2307
      %v2309 = vmul.f32 %v2250, 1.442695
      %v2310 = vpow.pop %v2309
      %v2311 = vmul.f32 %v2251, 1.442695
      %v2312 = vpow.pop %v2311
      %v2313 = vmul.f32 %v2252, 1.442695
      %v2314 = vpow.pop %v2313
      %v2315 = vmul.f32 %v2253, 1.442695
      %v2316 = vpow.pop %v2315
      %v2317 = vmul.f32 %v2254, 1.442695
      %v2318 = vpow.pop %v2317
      %v2319 = vsub.f32 %v1792, %v2095
      %v2320 = vsub.f32 %v1794, %v2096
      %v2321 = vsub.f32 %v1796, %v2097
      %v2322 = vsub.f32 %v1798, %v2098
      %v2323 = vsub.f32 %v1802, %v2099
      %v2324 = vsub.f32 %v1804, %v2100
      %v2325 = vsub.f32 %v1806, %v2101
      %v2326 = vsub.f32 %v1808, %v2102
      %v2327 = vsub.f32 %v1812, %v2103
      %v2328 = vsub.f32 %v1814, %v2104
      %v2329 = vsub.f32 %v1816, %v2105
      %v2330 = vsub.f32 %v1818, %v2106
      %v2331 = vsub.f32 %v1822, %v2107
      %v2332 = vsub.f32 %v1824, %v2108
      %v2333 = vsub.f32 %v1826, %v2109
      %v2334 = vsub.f32 %v1828, %v2110
      %v2335 = vsub.f32 %v1832, %v2111
      %v2336 = vsub.f32 %v1834, %v2112
      %v2337 = vsub.f32 %v1836, %v2113
      %v2338 = vsub.f32 %v1838, %v2114
      %v2339 = vsub.f32 %v1842, %v2115
      %v2340 = vsub.f32 %v1844, %v2116
      %v2341 = vsub.f32 %v1846, %v2117
      %v2342 = vsub.f32 %v1848, %v2118
      %v2343 = vsub.f32 %v1852, %v2119
      %v2344 = vsub.f32 %v1854, %v2120
      %v2345 = vsub.f32 %v1856, %v2121
      %v2346 = vsub.f32 %v1858, %v2122
      %v2347 = vsub.f32 %v1862, %v2123
      %v2348 = vsub.f32 %v1864, %v2124
      %v2349 = vsub.f32 %v1866, %v2125
      %v2350 = vsub.f32 %v1868, %v2126
      %v2351 = vmul.f32 %v2319, 1.442695
      %v2352 = vpow.pop %v2351
      %v2353 = vmul.f32 %v2320, 1.442695
      %v2354 = vpow.pop %v2353
      %v2355 = vmul.f32 %v2321, 1.442695
      %v2356 = vpow.pop %v2355
      %v2357 = vmul.f32 %v2322, 1.442695
      %v2358 = vpow.pop %v2357
      %v2359 = vmul.f32 %v2323, 1.442695
      %v2360 = vpow.pop %v2359
      %v2361 = vmul.f32 %v2324, 1.442695
      %v2362 = vpow.pop %v2361
      %v2363 = vmul.f32 %v2325, 1.442695
      %v2364 = vpow.pop %v2363
      %v2365 = vmul.f32 %v2326, 1.442695
      %v2366 = vpow.pop %v2365
      %v2367 = vmul.f32 %v2327, 1.442695
      %v2368 = vpow.pop %v2367
      %v2369 = vmul.f32 %v2328, 1.442695
      %v2370 = vpow.pop %v2369
      %v2371 = vmul.f32 %v2329, 1.442695
      %v2372 = vpow.pop %v2371
      %v2373 = vmul.f32 %v2330, 1.442695
      %v2374 = vpow.pop %v2373
      %v2375 = vmul.f32 %v2331, 1.442695
      %v2376 = vpow.pop %v2375
      %v2377 = vmul.f32 %v2332, 1.442695
      %v2378 = vpow.pop %v2377
      %v2379 = vmul.f32 %v2333, 1.442695
      %v2380 = vpow.pop %v2379
      %v2381 = vmul.f32 %v2334, 1.442695
      %v2382 = vpow.pop %v2381
      %v2383 = vmul.f32 %v2335, 1.442695
      %v2384 = vpow.pop %v2383
      %v2385 = vmul.f32 %v2336, 1.442695
      %v2386 = vpow.pop %v2385
      %v2387 = vmul.f32 %v2337, 1.442695
      %v2388 = vpow.pop %v2387
      %v2389 = vmul.f32 %v2338, 1.442695
      %v2390 = vpow.pop %v2389
      %v2391 = vmul.f32 %v2339, 1.442695
      %v2392 = vpow.pop %v2391
      %v2393 = vmul.f32 %v2340, 1.442695
      %v2394 = vpow.pop %v2393
      %v2395 = vmul.f32 %v2341, 1.442695
      %v2396 = vpow.pop %v2395
      %v2397 = vmul.f32 %v2342, 1.442695
      %v2398 = vpow.pop %v2397
      %v2399 = vmul.f32 %v2343, 1.442695
      %v2400 = vpow.pop %v2399
      %v2401 = vmul.f32 %v2344, 1.442695
      %v2402 = vpow.pop %v2401
      %v2403 = vmul.f32 %v2345, 1.442695
      %v2404 = vpow.pop %v2403
      %v2405 = vmul.f32 %v2346, 1.442695
      %v2406 = vpow.pop %v2405
      %v2407 = vmul.f32 %v2347, 1.442695
      %v2408 = vpow.pop %v2407
      %v2409 = vmul.f32 %v2348, 1.442695
      %v2410 = vpow.pop %v2409
      %v2411 = vmul.f32 %v2349, 1.442695
      %v2412 = vpow.pop %v2411
      %v2413 = vmul.f32 %v2350, 1.442695
      %v2414 = vpow.pop %v2413
      %v2415 = vsub.f32 %v1953, %v2095
      %v2416 = vsub.f32 %v1955, %v2096
      %v2417 = vsub.f32 %v1957, %v2097
      %v2418 = vsub.f32 %v1959, %v2098
      %v2419 = vsub.f32 %v1963, %v2099
      %v2420 = vsub.f32 %v1965, %v2100
      %v2421 = vsub.f32 %v1967, %v2101
      %v2422 = vsub.f32 %v1969, %v2102
      %v2423 = vsub.f32 %v1973, %v2103
      %v2424 = vsub.f32 %v1975, %v2104
      %v2425 = vsub.f32 %v1977, %v2105
      %v2426 = vsub.f32 %v1979, %v2106
      %v2427 = vsub.f32 %v1983, %v2107
      %v2428 = vsub.f32 %v1985, %v2108
      %v2429 = vsub.f32 %v1987, %v2109
      %v2430 = vsub.f32 %v1989, %v2110
      %v2431 = vsub.f32 %v1993, %v2111
      %v2432 = vsub.f32 %v1995, %v2112
      %v2433 = vsub.f32 %v1997, %v2113
      %v2434 = vsub.f32 %v1999, %v2114
      %v2435 = vsub.f32 %v2003, %v2115
      %v2436 = vsub.f32 %v2005, %v2116
      %v2437 = vsub.f32 %v2007, %v2117
      %v2438 = vsub.f32 %v2009, %v2118
      %v2439 = vsub.f32 %v2013, %v2119
      %v2440 = vsub.f32 %v2015, %v2120
      %v2441 = vsub.f32 %v2017, %v2121
      %v2442 = vsub.f32 %v2019, %v2122
      %v2443 = vsub.f32 %v2023, %v2123
      %v2444 = vsub.f32 %v2025, %v2124
      %v2445 = vsub.f32 %v2027, %v2125
      %v2446 = vsub.f32 %v2029, %v2126
      %v2447 = vmul.f32 %v2415, 1.442695
      %v2448 = vpow.pop %v2447
      %v2449 = vmul.f32 %v2416, 1.442695
      %v2450 = vpow.pop %v2449
      %v2451 = vmul.f32 %v2417, 1.442695
      %v2452 = vpow.pop %v2451
      %v2453 = vmul.f32 %v2418, 1.442695
      %v2454 = vpow.pop %v2453
      %v2455 = vmul.f32 %v2419, 1.442695
      %v2456 = vpow.pop %v2455
      %v2457 = vmul.f32 %v2420, 1.442695
      %v2458 = vpow.pop %v2457
      %v2459 = vmul.f32 %v2421, 1.442695
      %v2460 = vpow.pop %v2459
      %v2461 = vmul.f32 %v2422, 1.442695
      %v2462 = vpow.pop %v2461
      %v2463 = vmul.f32 %v2423, 1.442695
      %v2464 = vpow.pop %v2463
      %v2465 = vmul.f32 %v2424, 1.442695
      %v2466 = vpow.pop %v2465
      %v2467 = vmul.f32 %v2425, 1.442695
      %v2468 = vpow.pop %v2467
      %v2469 = vmul.f32 %v2426, 1.442695
      %v2470 = vpow.pop %v2469
      %v2471 = vmul.f32 %v2427, 1.442695
      %v2472 = vpow.pop %v2471
      %v2473 = vmul.f32 %v2428, 1.442695
      %v2474 = vpow.pop %v2473
      %v2475 = vmul.f32 %v2429, 1.442695
      %v2476 = vpow.pop %v2475
      %v2477 = vmul.f32 %v2430, 1.442695
      %v2478 = vpow.pop %v2477
      %v2479 = vmul.f32 %v2431, 1.442695
      %v2480 = vpow.pop %v2479
      %v2481 = vmul.f32 %v2432, 1.442695
      %v2482 = vpow.pop %v2481
      %v2483 = vmul.f32 %v2433, 1.442695
      %v2484 = vpow.pop %v2483
      %v2485 = vmul.f32 %v2434, 1.442695
      %v2486 = vpow.pop %v2485
      %v2487 = vmul.f32 %v2435, 1.442695
      %v2488 = vpow.pop %v2487
      %v2489 = vmul.f32 %v2436, 1.442695
      %v2490 = vpow.pop %v2489
      %v2491 = vmul.f32 %v2437, 1.442695
      %v2492 = vpow.pop %v2491
      %v2493 = vmul.f32 %v2438, 1.442695
      %v2494 = vpow.pop %v2493
      %v2495 = vmul.f32 %v2439, 1.442695
      %v2496 = vpow.pop %v2495
      %v2497 = vmul.f32 %v2440, 1.442695
      %v2498 = vpow.pop %v2497
      %v2499 = vmul.f32 %v2441, 1.442695
      %v2500 = vpow.pop %v2499
      %v2501 = vmul.f32 %v2442, 1.442695
      %v2502 = vpow.pop %v2501
      %v2503 = vmul.f32 %v2443, 1.442695
      %v2504 = vpow.pop %v2503
      %v2505 = vmul.f32 %v2444, 1.442695
      %v2506 = vpow.pop %v2505
      %v2507 = vmul.f32 %v2445, 1.442695
      %v2508 = vpow.pop %v2507
      %v2509 = vmul.f32 %v2446, 1.442695
      %v2510 = vpow.pop %v2509
      %v2511 = vadd.f32 %v2160, %v2256
      %v2512 = vadd.f32 %v2162, %v2258
      %v2513 = vadd.f32 %v2164, %v2260
      %v2514 = vadd.f32 %v2166, %v2262
      %v2515 = vadd.f32 %v2168, %v2264
      %v2516 = vadd.f32 %v2170, %v2266
      %v2517 = vadd.f32 %v2172, %v2268
      %v2518 = vadd.f32 %v2174, %v2270
      %v2519 = vadd.f32 %v2176, %v2272
      %v2520 = vadd.f32 %v2178, %v2274
      %v2521 = vadd.f32 %v2180, %v2276
      %v2522 = vadd.f32 %v2182, %v2278
      %v2523 = vadd.f32 %v2184, %v2280
      %v2524 = vadd.f32 %v2186, %v2282
      %v2525 = vadd.f32 %v2188, %v2284
      %v2526 = vadd.f32 %v2190, %v2286
      %v2527 = vadd.f32 %v2192, %v2288
      %v2528 = vadd.f32 %v2194, %v2290
      %v2529 = vadd.f32 %v2196, %v2292
      %v2530 = vadd.f32 %v2198, %v2294
      %v2531 = vadd.f32 %v2200, %v2296
      %v2532 = vadd.f32 %v2202, %v2298
      %v2533 = vadd.f32 %v2204, %v2300
      %v2534 = vadd.f32 %v2206, %v2302
      %v2535 = vadd.f32 %v2208, %v2304
      %v2536 = vadd.f32 %v2210, %v2306
      %v2537 = vadd.f32 %v2212, %v2308
      %v2538 = vadd.f32 %v2214, %v2310
      %v2539 = vadd.f32 %v2216, %v2312
      %v2540 = vadd.f32 %v2218, %v2314
      %v2541 = vadd.f32 %v2220, %v2316
      %v2542 = vadd.f32 %v2222, %v2318
      %v2543 = vadd.f32 %v2511, %v2352
      %v2544 = vadd.f32 %v2512, %v2354
      %v2545 = vadd.f32 %v2513, %v2356
      %v2546 = vadd.f32 %v2514, %v2358
      %v2547 = vadd.f32 %v2515, %v2360
      %v2548 = vadd.f32 %v2516, %v2362
      %v2549 = vadd.f32 %v2517, %v2364
      %v2550 = vadd.f32 %v2518, %v2366
      %v2551 = vadd.f32 %v2519, %v2368
      %v2552 = vadd.f32 %v2520, %v2370
      %v2553 = vadd.f32 %v2521, %v2372
      %v2554 = vadd.f32 %v2522, %v2374
      %v2555 = vadd.f32 %v2523, %v2376
      %v2556 = vadd.f32 %v2524, %v2378
      %v2557 = vadd.f32 %v2525, %v2380
      %v2558 = vadd.f32 %v2526, %v2382
      %v2559 = vadd.f32 %v2527, %v2384
      %v2560 = vadd.f32 %v2528, %v2386
      %v2561 = vadd.f32 %v2529, %v2388
      %v2562 = vadd.f32 %v2530, %v2390
      %v2563 = vadd.f32 %v2531, %v2392
      %v2564 = vadd.f32 %v2532, %v2394
      %v2565 = vadd.f32 %v2533, %v2396
      %v2566 = vadd.f32 %v2534, %v2398
      %v2567 = vadd.f32 %v2535, %v2400
      %v2568 = vadd.f32 %v2536, %v2402
      %v2569 = vadd.f32 %v2537, %v2404
      %v2570 = vadd.f32 %v2538, %v2406
      %v2571 = vadd.f32 %v2539, %v2408
      %v2572 = vadd.f32 %v2540, %v2410
      %v2573 = vadd.f32 %v2541, %v2412
      %v2574 = vadd.f32 %v2542, %v2414
      %v2575 = vadd.f32 %v2543, %v2448
      %v2576 = vadd.f32 %v2544, %v2450
      %v2577 = vadd.f32 %v2545, %v2452
      %v2578 = vadd.f32 %v2546, %v2454
      %v2579 = vadd.f32 %v2547, %v2456
      %v2580 = vadd.f32 %v2548, %v2458
      %v2581 = vadd.f32 %v2549, %v2460
      %v2582 = vadd.f32 %v2550, %v2462
      %v2583 = vadd.f32 %v2551, %v2464
      %v2584 = vadd.f32 %v2552, %v2466
      %v2585 = vadd.f32 %v2553, %v2468
      %v2586 = vadd.f32 %v2554, %v2470
      %v2587 = vadd.f32 %v2555, %v2472
      %v2588 = vadd.f32 %v2556, %v2474
      %v2589 = vadd.f32 %v2557, %v2476
      %v2590 = vadd.f32 %v2558, %v2478
      %v2591 = vadd.f32 %v2559, %v2480
      %v2592 = vadd.f32 %v2560, %v2482
      %v2593 = vadd.f32 %v2561, %v2484
      %v2594 = vadd.f32 %v2562, %v2486
      %v2595 = vadd.f32 %v2563, %v2488
      %v2596 = vadd.f32 %v2564, %v2490
      %v2597 = vadd.f32 %v2565, %v2492
      %v2598 = vadd.f32 %v2566, %v2494
      %v2599 = vadd.f32 %v2567, %v2496
      %v2600 = vadd.f32 %v2568, %v2498
      %v2601 = vadd.f32 %v2569, %v2500
      %v2602 = vadd.f32 %v2570, %v2502
      %v2603 = vadd.f32 %v2571, %v2504
      %v2604 = vadd.f32 %v2572, %v2506
      %v2605 = vadd.f32 %v2573, %v2508
      %v2606 = vadd.f32 %v2574, %v2510
      %v2607 = vmul.f32 %v2160, %v1213
      %v2608 = vmul.f32 %v2162, %v1215
      %v2609 = vmul.f32 %v2164, %v1217
      %v2610 = vmul.f32 %v2166, %v1219
      %v2611 = vmul.f32 %v2168, %v1223
      %v2612 = vmul.f32 %v2170, %v1225
      %v2613 = vmul.f32 %v2172, %v1227
      %v2614 = vmul.f32 %v2174, %v1229
      %v2615 = vmul.f32 %v2176, %v1233
      %v2616 = vmul.f32 %v2178, %v1235
      %v2617 = vmul.f32 %v2180, %v1237
      %v2618 = vmul.f32 %v2182, %v1239
      %v2619 = vmul.f32 %v2184, %v1243
      %v2620 = vmul.f32 %v2186, %v1245
      %v2621 = vmul.f32 %v2188, %v1247
      %v2622 = vmul.f32 %v2190, %v1249
      %v2623 = vmul.f32 %v2192, %v1253
      %v2624 = vmul.f32 %v2194, %v1255
      %v2625 = vmul.f32 %v2196, %v1257
      %v2626 = vmul.f32 %v2198, %v1259
      %v2627 = vmul.f32 %v2200, %v1263
      %v2628 = vmul.f32 %v2202, %v1265
      %v2629 = vmul.f32 %v2204, %v1267
      %v2630 = vmul.f32 %v2206, %v1269
      %v2631 = vmul.f32 %v2208, %v1273
      %v2632 = vmul.f32 %v2210, %v1275
      %v2633 = vmul.f32 %v2212, %v1277
      %v2634 = vmul.f32 %v2214, %v1279
      %v2635 = vmul.f32 %v2216, %v1283
      %v2636 = vmul.f32 %v2218, %v1285
      %v2637 = vmul.f32 %v2220, %v1287
      %v2638 = vmul.f32 %v2222, %v1289
      %v2639 = vmul.f32 %v2256, %v1233
      %v2640 = vmul.f32 %v2258, %v1235
      %v2641 = vmul.f32 %v2260, %v1237
      %v2642 = vmul.f32 %v2262, %v1239
      %v2643 = vmul.f32 %v2264, %v1243
      %v2644 = vmul.f32 %v2266, %v1245
      %v2645 = vmul.f32 %v2268, %v1247
      %v2646 = vmul.f32 %v2270, %v1249
      %v2647 = vmul.f32 %v2272, %v1253
      %v2648 = vmul.f32 %v2274, %v1255
      %v2649 = vmul.f32 %v2276, %v1257
      %v2650 = vmul.f32 %v2278, %v1259
      %v2651 = vmul.f32 %v2280, %v1263
      %v2652 = vmul.f32 %v2282, %v1265
      %v2653 = vmul.f32 %v2284, %v1267
      %v2654 = vmul.f32 %v2286, %v1269
      %v2655 = vmul.f32 %v2288, %v1273
      %v2656 = vmul.f32 %v2290, %v1275
      %v2657 = vmul.f32 %v2292, %v1277
      %v2658 = vmul.f32 %v2294, %v1279
      %v2659 = vmul.f32 %v2296, %v1283
      %v2660 = vmul.f32 %v2298, %v1285
      %v2661 = vmul.f32 %v2300, %v1287
      %v2662 = vmul.f32 %v2302, %v1289
      %v2663 = vmul.f32 %v2304, %v1213
      %v2664 = vmul.f32 %v2306, %v1215
      %v2665 = vmul.f32 %v2308, %v1217
      %v2666 = vmul.f32 %v2310, %v1219
      %v2667 = vmul.f32 %v2312, %v1223
      %v2668 = vmul.f32 %v2314, %v1225
      %v2669 = vmul.f32 %v2316, %v1227
      %v2670 = vmul.f32 %v2318, %v1229
      %v2671 = vadd.f32 %v2607, %v2639
      %v2672 = vadd.f32 %v2608, %v2640
      %v2673 = vadd.f32 %v2609, %v2641
      %v2674 = vadd.f32 %v2610, %v2642
      %v2675 = vadd.f32 %v2611, %v2643
      %v2676 = vadd.f32 %v2612, %v2644
      %v2677 = vadd.f32 %v2613, %v2645
      %v2678 = vadd.f32 %v2614, %v2646
      %v2679 = vadd.f32 %v2615, %v2647
      %v2680 = vadd.f32 %v2616, %v2648
      %v2681 = vadd.f32 %v2617, %v2649
      %v2682 = vadd.f32 %v2618, %v2650
      %v2683 = vadd.f32 %v2619, %v2651
      %v2684 = vadd.f32 %v2620, %v2652
      %v2685 = vadd.f32 %v2621, %v2653
      %v2686 = vadd.f32 %v2622, %v2654
      %v2687 = vadd.f32 %v2623, %v2655
      %v2688 = vadd.f32 %v2624, %v2656
      %v2689 = vadd.f32 %v2625, %v2657
      %v2690 = vadd.f32 %v2626, %v2658
      %v2691 = vadd.f32 %v2627, %v2659
      %v2692 = vadd.f32 %v2628, %v2660
      %v2693 = vadd.f32 %v2629, %v2661
      %v2694 = vadd.f32 %v2630, %v2662
      %v2695 = vadd.f32 %v2631, %v2663
      %v2696 = vadd.f32 %v2632, %v2664
      %v2697 = vadd.f32 %v2633, %v2665
      %v2698 = vadd.f32 %v2634, %v2666
      %v2699 = vadd.f32 %v2635, %v2667
      %v2700 = vadd.f32 %v2636, %v2668
      %v2701 = vadd.f32 %v2637, %v2669
      %v2702 = vadd.f32 %v2638, %v2670
      %v2703 = vmul.f32 %v2352, %v1253
      %v2704 = vmul.f32 %v2354, %v1255
      %v2705 = vmul.f32 %v2356, %v1257
      %v2706 = vmul.f32 %v2358, %v1259
      %v2707 = vmul.f32 %v2360, %v1263
      %v2708 = vmul.f32 %v2362, %v1265
      %v2709 = vmul.f32 %v2364, %v1267
      %v2710 = vmul.f32 %v2366, %v1269
      %v2711 = vmul.f32 %v2368, %v1273
      %v2712 = vmul.f32 %v2370, %v1275
      %v2713 = vmul.f32 %v2372, %v1277
      %v2714 = vmul.f32 %v2374, %v1279
      %v2715 = vmul.f32 %v2376, %v1283
      %v2716 = vmul.f32 %v2378, %v1285
      %v2717 = vmul.f32 %v2380, %v1287
      %v2718 = vmul.f32 %v2382, %v1289
      %v2719 = vmul.f32 %v2384, %v1213
      %v2720 = vmul.f32 %v2386, %v1215
      %v2721 = vmul.f32 %v2388, %v1217
      %v2722 = vmul.f32 %v2390, %v1219
      %v2723 = vmul.f32 %v2392, %v1223
      %v2724 = vmul.f32 %v2394, %v1225
      %v2725 = vmul.f32 %v2396, %v1227
      %v2726 = vmul.f32 %v2398, %v1229
      %v2727 = vmul.f32 %v2400, %v1233
      %v2728 = vmul.f32 %v2402, %v1235
      %v2729 = vmul.f32 %v2404, %v1237
      %v2730 = vmul.f32 %v2406, %v1239
      %v2731 = vmul.f32 %v2408, %v1243
      %v2732 = vmul.f32 %v2410, %v1245
      %v2733 = vmul.f32 %v2412, %v1247
      %v2734 = vmul.f32 %v2414, %v1249
      %v2735 = vadd.f32 %v2671, %v2703
      %v2736 = vadd.f32 %v2672, %v2704
      %v2737 = vadd.f32 %v2673, %v2705
      %v2738 = vadd.f32 %v2674, %v2706
      %v2739 = vadd.f32 %v2675, %v2707
      %v2740 = vadd.f32 %v2676, %v2708
      %v2741 = vadd.f32 %v2677, %v2709
      %v2742 = vadd.f32 %v2678, %v2710
      %v2743 = vadd.f32 %v2679, %v2711
      %v2744 = vadd.f32 %v2680, %v2712
      %v2745 = vadd.f32 %v2681, %v2713
      %v2746 = vadd.f32 %v2682, %v2714
      %v2747 = vadd.f32 %v2683, %v2715
      %v2748 = vadd.f32 %v2684, %v2716
      %v2749 = vadd.f32 %v2685, %v2717
      %v2750 = vadd.f32 %v2686, %v2718
      %v2751 = vadd.f32 %v2687, %v2719
      %v2752 = vadd.f32 %v2688, %v2720
      %v2753 = vadd.f32 %v2689, %v2721
      %v2754 = vadd.f32 %v2690, %v2722
      %v2755 = vadd.f32 %v2691, %v2723
      %v2756 = vadd.f32 %v2692, %v2724
      %v2757 = vadd.f32 %v2693, %v2725
      %v2758 = vadd.f32 %v2694, %v2726
      %v2759 = vadd.f32 %v2695, %v2727
      %v2760 = vadd.f32 %v2696, %v2728
      %v2761 = vadd.f32 %v2697, %v2729
      %v2762 = vadd.f32 %v2698, %v2730
      %v2763 = vadd.f32 %v2699, %v2731
      %v2764 = vadd.f32 %v2700, %v2732
      %v2765 = vadd.f32 %v2701, %v2733
      %v2766 = vadd.f32 %v2702, %v2734
      %v2767 = vmul.f32 %v2448, %v1273
      %v2768 = vmul.f32 %v2450, %v1275
      %v2769 = vmul.f32 %v2452, %v1277
      %v2770 = vmul.f32 %v2454, %v1279
      %v2771 = vmul.f32 %v2456, %v1283
      %v2772 = vmul.f32 %v2458, %v1285
      %v2773 = vmul.f32 %v2460, %v1287
      %v2774 = vmul.f32 %v2462, %v1289
      %v2775 = vmul.f32 %v2464, %v1213
      %v2776 = vmul.f32 %v2466, %v1215
      %v2777 = vmul.f32 %v2468, %v1217
      %v2778 = vmul.f32 %v2470, %v1219
      %v2779 = vmul.f32 %v2472, %v1223
      %v2780 = vmul.f32 %v2474, %v1225
      %v2781 = vmul.f32 %v2476, %v1227
      %v2782 = vmul.f32 %v2478, %v1229
      %v2783 = vmul.f32 %v2480, %v1233
      %v2784 = vmul.f32 %v2482, %v1235
      %v2785 = vmul.f32 %v2484, %v1237
      %v2786 = vmul.f32 %v2486, %v1239
      %v2787 = vmul.f32 %v2488, %v1243
      %v2788 = vmul.f32 %v2490, %v1245
      %v2789 = vmul.f32 %v2492, %v1247
      %v2790 = vmul.f32 %v2494, %v1249
      %v2791 = vmul.f32 %v2496, %v1253
      %v2792 = vmul.f32 %v2498, %v1255
      %v2793 = vmul.f32 %v2500, %v1257
      %v2794 = vmul.f32 %v2502, %v1259
      %v2795 = vmul.f32 %v2504, %v1263
      %v2796 = vmul.f32 %v2506, %v1265
      %v2797 = vmul.f32 %v2508, %v1267
      %v2798 = vmul.f32 %v2510, %v1269
      %v2799 = vadd.f32 %v2735, %v2767
      %v2800 = vadd.f32 %v2736, %v2768
      %v2801 = vadd.f32 %v2737, %v2769
      %v2802 = vadd.f32 %v2738, %v2770
      %v2803 = vadd.f32 %v2739, %v2771
      %v2804 = vadd.f32 %v2740, %v2772
      %v2805 = vadd.f32 %v2741, %v2773
      %v2806 = vadd.f32 %v2742, %v2774
      %v2807 = vadd.f32 %v2743, %v2775
      %v2808 = vadd.f32 %v2744, %v2776
      %v2809 = vadd.f32 %v2745, %v2777
      %v2810 = vadd.f32 %v2746, %v2778
      %v2811 = vadd.f32 %v2747, %v2779
      %v2812 = vadd.f32 %v2748, %v2780
      %v2813 = vadd.f32 %v2749, %v2781
      %v2814 = vadd.f32 %v2750, %v2782
      %v2815 = vadd.f32 %v2751, %v2783
      %v2816 = vadd.f32 %v2752, %v2784
      %v2817 = vadd.f32 %v2753, %v2785
      %v2818 = vadd.f32 %v2754, %v2786
      %v2819 = vadd.f32 %v2755, %v2787
      %v2820 = vadd.f32 %v2756, %v2788
      %v2821 = vadd.f32 %v2757, %v2789
      %v2822 = vadd.f32 %v2758, %v2790
      %v2823 = vadd.f32 %v2759, %v2791
      %v2824 = vadd.f32 %v2760, %v2792
      %v2825 = vadd.f32 %v2761, %v2793
      %v2826 = vadd.f32 %v2762, %v2794
      %v2827 = vadd.f32 %v2763, %v2795
      %v2828 = vadd.f32 %v2764, %v2796
      %v2829 = vadd.f32 %v2765, %v2797
      %v2830 = vadd.f32 %v2766, %v2798
      %v2831 = vrcp.pop %v2575
      %v2832 = vrcp.pop %v2576
      %v2833 = vrcp.pop %v2577
      %v2834 = vrcp.pop %v2578
      %v2835 = vrcp.pop %v2579
      %v2836 = vrcp.pop %v2580
      %v2837 = vrcp.pop %v2581
      %v2838 = vrcp.pop %v2582
      %v2839 = vrcp.pop %v2583
      %v2840 = vrcp.pop %v2584
      %v2841 = vrcp.pop %v2585
      %v2842 = vrcp.pop %v2586
      %v2843 = vrcp.pop %v2587
      %v2844 = vrcp.pop %v2588
      %v2845 = vrcp.pop %v2589
      %v2846 = vrcp.pop %v2590
      %v2847 = vrcp.pop %v2591
      %v2848 = vrcp.pop %v2592
      %v2849 = vrcp.pop %v2593
      %v2850 = vrcp.pop %v2594
      %v2851 = vrcp.pop %v2595
      %v2852 = vrcp.pop %v2596
      %v2853 = vrcp.pop %v2597
      %v2854 = vrcp.pop %v2598
      %v2855 = vrcp.pop %v2599
      %v2856 = vrcp.pop %v2600
      %v2857 = vrcp.pop %v2601
      %v2858 = vrcp.pop %v2602
      %v2859 = vrcp.pop %v2603
      %v2860 = vrcp.pop %v2604
      %v2861 = vrcp.pop %v2605
      %v2862 = vrcp.pop %v2606
      %v2863 = vmul.f32 %v2799, %v2831
      %v2864 = vmul.f32 %v2800, %v2832
      %v2865 = vmul.f32 %v2801, %v2833
      %v2866 = vmul.f32 %v2802, %v2834
      %v2867 = vmul.f32 %v2803, %v2835
      %v2868 = vmul.f32 %v2804, %v2836
      %v2869 = vmul.f32 %v2805, %v2837
      %v2870 = vmul.f32 %v2806, %v2838
      %v2871 = vmul.f32 %v2807, %v2839
      %v2872 = vmul.f32 %v2808, %v2840
      %v2873 = vmul.f32 %v2809, %v2841
      %v2874 = vmul.f32 %v2810, %v2842
      %v2875 = vmul.f32 %v2811, %v2843
      %v2876 = vmul.f32 %v2812, %v2844
      %v2877 = vmul.f32 %v2813, %v2845
      %v2878 = vmul.f32 %v2814, %v2846
      %v2879 = vmul.f32 %v2815, %v2847
      %v2880 = vmul.f32 %v2816, %v2848
      %v2881 = vmul.f32 %v2817, %v2849
      %v2882 = vmul.f32 %v2818, %v2850
      %v2883 = vmul.f32 %v2819, %v2851
      %v2884 = vmul.f32 %v2820, %v2852
      %v2885 = vmul.f32 %v2821, %v2853
      %v2886 = vmul.f32 %v2822, %v2854
      %v2887 = vmul.f32 %v2823, %v2855
      %v2888 = vmul.f32 %v2824, %v2856
      %v2889 = vmul.f32 %v2825, %v2857
      %v2890 = vmul.f32 %v2826, %v2858
      %v2891 = vmul.f32 %v2827, %v2859
      %v2892 = vmul.f32 %v2828, %v2860
      %v2893 = vmul.f32 %v2829, %v2861
      %v2894 = vmul.f32 %v2830, %v2862
      %v2895 = vld [vmem:[%s4] sm:$0xf]
      %v2896 = vld [vmem:[%s4 + $0x4] sm:$0xf]
      %v2897 = vld [vmem:[%s4 + $0x8] sm:$0xf]
      %v2898 = vld [vmem:[%s4 + $0xc] sm:$0xf]
      %v2899 = vld [vmem:[%s4 + $0x10] sm:$0xf]
      %v2900 = vld [vmem:[%s4 + $0x14] sm:$0xf]
      %v2901 = vld [vmem:[%s4 + $0x18] sm:$0xf]
      %v2902 = vld [vmem:[%s4 + $0x1c] sm:$0xf]
      %v2903 = vpack.c.bf16 %v2865, %v2863
      %v2904 = vpack.c.bf16 %v2866, %v2864
      %v2905 = vpack.c.bf16 %v2869, %v2867
      %v2906 = vpack.c.bf16 %v2870, %v2868
      %v2907 = vpack.c.bf16 %v2873, %v2871
      %v2908 = vpack.c.bf16 %v2874, %v2872
      %v2909 = vpack.c.bf16 %v2877, %v2875
      %v2910 = vpack.c.bf16 %v2878, %v2876
      %v2911 = vpack.c.bf16 %v2881, %v2879
      %v2912 = vpack.c.bf16 %v2882, %v2880
      %v2913 = vpack.c.bf16 %v2885, %v2883
      %v2914 = vpack.c.bf16 %v2886, %v2884
      %v2915 = vpack.c.bf16 %v2889, %v2887
      %v2916 = vpack.c.bf16 %v2890, %v2888
      %v2917 = vpack.c.bf16 %v2893, %v2891
      %v2918 = vpack.c.bf16 %v2894, %v2892
      %v2919 = vld [vmem:[%s5] sm:$0xff]
      %v2920 = vld [vmem:[%s5 + $0x8] sm:$0xff]
      %v2921 = vld [vmem:[%s5 + $0x10] sm:$0xff]
      %v2922 = vld [vmem:[%s5 + $0x18] sm:$0xff]
      %v2923 = vld [vmem:[%s5 + $0x20] sm:$0xff]
      %v2924 = vld [vmem:[%s5 + $0x28] sm:$0xff]
      %v2925 = vld [vmem:[%s5 + $0x30] sm:$0xff]
      %v2926 = vld [vmem:[%s5 + $0x38] sm:$0xff]
      %2928 = vset.pattern.permute.xlu0 0
      %2929 = vperm.xlu0 %2928, %v2919
      %v2930 = vpop.permute.xlu0 %2929
      %2933 = vset.pattern.permute.xlu0 0
      %2934 = vperm.xlu0 %2933, %v2920
      %v2935 = vpop.permute.xlu0 %2934
      %2938 = vset.pattern.permute.xlu0 0
      %2939 = vperm.xlu0 %2938, %v2921
      %v2940 = vpop.permute.xlu0 %2939
      %2943 = vset.pattern.permute.xlu0 0
      %2944 = vperm.xlu0 %2943, %v2922
      %v2945 = vpop.permute.xlu0 %2944
      %2948 = vset.pattern.permute.xlu0 0
      %2949 = vperm.xlu0 %2948, %v2923
      %v2950 = vpop.permute.xlu0 %2949
      %2953 = vset.pattern.permute.xlu0 0
      %2954 = vperm.xlu0 %2953, %v2924
      %v2955 = vpop.permute.xlu0 %2954
      %2958 = vset.pattern.permute.xlu0 0
      %2959 = vperm.xlu0 %2958, %v2925
      %v2960 = vpop.permute.xlu0 %2959
      %2963 = vset.pattern.permute.xlu0 0
      %2964 = vperm.xlu0 %2963, %v2926
      %v2965 = vpop.permute.xlu0 %2964
      %v2975 = vunpack.c.l.b16 %v2895
      %v2976 = vunpack.c.l.b16 %v2896
      %v2977 = vunpack.c.l.b16 %v2897
      %v2978 = vunpack.c.l.b16 %v2898
      %v2979 = vunpack.c.l.b16 %v2899
      %v2980 = vunpack.c.l.b16 %v2900
      %v2981 = vunpack.c.l.b16 %v2901
      %v2982 = vunpack.c.l.b16 %v2902
      %v2983 = vpack.c.b16 %v2976, %v2975
      %v2984 = vpack.c.b16 %v2978, %v2977
      %v2985 = vpack.c.b16 %v2980, %v2979
      %v2986 = vpack.c.b16 %v2982, %v2981
      %2991 = vmatprep.subr.bf16.mxu0 %v2904
      %2992 = vmatpush1.bf16.msra.mxu0 %v2903
      %2993 = vmatprep.subr.bf16.mxu0 %v2906
      %2994 = vmatpush1.bf16.msra.mxu0 %v2905
      %2995 = vmatprep.subr.bf16.mxu0 %v2908
      %2996 = vmatpush1.bf16.msra.mxu0 %v2907
      %2997 = vmatprep.subr.bf16.mxu0 %v2910
      %2998 = vmatpush1.bf16.msra.mxu0 %v2909
      %2999 = vmatprep.subr.bf16.mxu0 %v2912
      %3000 = vmatpush1.bf16.msra.mxu0 %v2911
      %3001 = vmatprep.subr.bf16.mxu0 %v2914
      %3002 = vmatpush1.bf16.msra.mxu0 %v2913
      %3003 = vmatprep.subr.bf16.mxu0 %v2916
      %3004 = vmatpush1.bf16.msra.mxu0 %v2915
      %3005 = vmatprep.subr.bf16.mxu0 %v2918
      %3006 = vmatpush1.bf16.msra.mxu0 %v2917
      %3007 = vmatprep.subr.bf16.mxu0 0
      %3008 = vmatpush1.bf16.msra.mxu0 0
      %3009 = vmatprep.subr.bf16.mxu0 0
      %3010 = vmatpush1.bf16.msra.mxu0 0
      %3011 = vmatprep.subr.bf16.mxu0 0
      %3012 = vmatpush1.bf16.msra.mxu0 0
      %3013 = vmatprep.subr.bf16.mxu0 0
      %3014 = vmatpush1.bf16.msra.mxu0 0
      %3015 = vmatprep.subr.bf16.mxu0 0
      %3016 = vmatpush1.bf16.msra.mxu0 0
      %3017 = vmatprep.subr.bf16.mxu0 0
      %3018 = vmatpush1.bf16.msra.mxu0 0
      %3019 = vmatprep.subr.bf16.mxu0 0
      %3020 = vmatpush1.bf16.msra.mxu0 0
      %3021 = vmatprep.subr.bf16.mxu0 0
      %3022 = vmatpush1.bf16.msra.mxu0 0
      %3023 = vmatprep.mubr.bf16.mxu0 0
      %3024 = vmatmul.mubr.bf16.gmra.mrb[0].mxu0 %v2983
      %v3025 = vpop.f32.mrb[0].mxu0
      %v3026 = vadd.f32 %v2930, %v3025
      %v3027 = vpop.f32.mrb[0].mxu0
      %v3028 = vadd.f32 %v2930, %v3027
      %v3029 = vpop.f32.mrb[0].mxu0
      %v3030 = vadd.f32 %v2935, %v3029
      %v3031 = vpop.f32.mrb[0].mxu0
      %v3032 = vadd.f32 %v2935, %v3031
      %3033 = vmatprep.mubr.bf16.mxu0 0
      %3034 = vmatmul.mubr.bf16.gmra.mrb[0].mxu0 %v2984
      %v3035 = vpop.f32.mrb[0].mxu0
      %v3036 = vadd.f32 %v2940, %v3035
      %v3037 = vpop.f32.mrb[0].mxu0
      %v3038 = vadd.f32 %v2940, %v3037
      %v3039 = vpop.f32.mrb[0].mxu0
      %v3040 = vadd.f32 %v2945, %v3039
      %v3041 = vpop.f32.mrb[0].mxu0
      %v3042 = vadd.f32 %v2945, %v3041
      %3043 = vmatprep.mubr.bf16.mxu0 0
      %3044 = vmatmul.mubr.bf16.gmra.mrb[0].mxu0 %v2985
      %v3045 = vpop.f32.mrb[0].mxu0
      %v3046 = vadd.f32 %v2950, %v3045
      %v3047 = vpop.f32.mrb[0].mxu0
      %v3048 = vadd.f32 %v2950, %v3047
      %v3049 = vpop.f32.mrb[0].mxu0
      %v3050 = vadd.f32 %v2955, %v3049
      %v3051 = vpop.f32.mrb[0].mxu0
      %v3052 = vadd.f32 %v2955, %v3051
      %3053 = vmatprep.mubr.bf16.mxu0 0
      %3054 = vmatmul.mubr.bf16.gmra.mrb[0].mxu0 %v2986
      %v3055 = vpop.f32.mrb[0].mxu0
      %v3056 = vadd.f32 %v2960, %v3055
      %v3057 = vpop.f32.mrb[0].mxu0
      %v3058 = vadd.f32 %v2960, %v3057
      %v3059 = vpop.f32.mrb[0].mxu0
      %v3060 = vadd.f32 %v2965, %v3059
      %v3061 = vpop.f32.mrb[0].mxu0
      %v3062 = vadd.f32 %v2965, %v3061
      %3063 = vdwg.mxu0
      %3064 = vst [vmem:[%s336] sm:$0xff] %v3026
      %3065 = vst [vmem:[%s336 + $0x8] sm:$0xff] %v3028
      %3066 = vst [vmem:[%s336 + $0x10] sm:$0xff] %v3030
      %3067 = vst [vmem:[%s336 + $0x18] sm:$0xff] %v3032
      %3068 = vst [vmem:[%s336 + $0x20] sm:$0xff] %v3036
      %3069 = vst [vmem:[%s336 + $0x28] sm:$0xff] %v3038
      %3070 = vst [vmem:[%s336 + $0x30] sm:$0xff] %v3040
      %3071 = vst [vmem:[%s336 + $0x38] sm:$0xff] %v3042
      %3072 = vst [vmem:[%s336 + $0x40] sm:$0xff] %v3046
      %3073 = vst [vmem:[%s336 + $0x48] sm:$0xff] %v3048
      %3074 = vst [vmem:[%s336 + $0x50] sm:$0xff] %v3050
      %3075 = vst [vmem:[%s336 + $0x58] sm:$0xff] %v3052
      %3076 = vst [vmem:[%s336 + $0x60] sm:$0xff] %v3056
      %3077 = vst [vmem:[%s336 + $0x68] sm:$0xff] %v3058
      %3078 = vst [vmem:[%s336 + $0x70] sm:$0xff] %v3060
      %3079 = vst [vmem:[%s336 + $0x78] sm:$0xff] %v3062
      %s3080 = smul.u32 2, %s23
      %p3081 = scmp.lt.s32.totalorder %s22, 1
      %s3082 = scalar_select %p3081, %s22, 1
      %p3083 = scmp.lt.s32.totalorder %s3080, 1
      %s3084 = scalar_select %p3083, %s3080, 1
      %s3085 = smul.addr %s3082, 16
      %s3086 = sadd.s32 %s3084, %s3085
      %s3087 = smul.addr %s3086, 8
      %s3088 = scalar_lea.vmem %s7, %s3087
      // Predicated region
      $region49: #{time_attention_forward.1} parent=47 // pred_check
        %p3089 = pneg %p209
      $region50: #{time_attention_forward.1} parent=47 // pred_check_branch
        %3091 = sbr.rel (%p3089) target = $region52
      $region51: #{time_attention_forward.1} parent=47 // pred_region
        %s3092 = smul.u32 2, %s23
      $region52: #{time_attention_forward.1} parent=47 // pred_fallthru
        _
    $region48: #{time_attention_forward.1} parent=5 // pred_fallthru
      _
    %p3093 = scmp.le.s32.totalorder 2, %s13
    // Predicated region
    $region53: #{time_attention_forward.1} parent=5 // pred_check
      %p3094 = pneg %p3093
    $region54: #{time_attention_forward.1} parent=5 // pred_check_branch
      %3096 = sbr.rel (%p3094) target = $region56
    $region55: #{time_attention_forward.1} parent=5 // pred_region
      %s3097 = ssub.s32 %s13, 2
      // Predicated region
      $region57: #{time_attention_forward.1} parent=55 // pred_check
        %p3098 = pneg %p215
      $region58: #{time_attention_forward.1} parent=55 // pred_check_branch
        %3100 = sbr.rel (%p3098) target = $region60
      $region59: #{time_attention_forward.1} parent=55 // pred_region
        %s3101 = smul.u32 2, %s25
        %p3102 = scmp.lt.s32.totalorder %s24, 1
        %s3103 = scalar_select %p3102, %s24, 1
        %p3104 = scmp.lt.s32.totalorder %s3101, 1
        %s3105 = scalar_select %p3104, %s3101, 1
        %s3106 = smul.addr %s3103, 16
        %s3107 = sadd.s32 %s3105, %s3106
        %s3108 = smul.addr %s3107, 8
        %s3109 = scalar_lea.vmem %s7, %s3108
      $region60: #{time_attention_forward.1} parent=55 // pred_fallthru
        _
    $region56: #{time_attention_forward.1} parent=5 // pred_fallthru
      _
  $region6: #{time_attention_forward.1} parent=0 // loop_footer
    %s17 = sadd.s32 1, %s13
  $region7: #{time_attention_forward.1} parent=0 // loop_footer_branch
    %12 = sbr.rel target = $region3
  $region8: #{time_attention_forward.1} parent=0 // loop_exit
    _

</llo_original>
